<compile_context>
chip_gen: v6e
topology: v6e:2x2x1
jax: 0.10.0
libtpu: 0.0.40
codegen_flags: <defaults>
</compile_context>

<pallas_src>
import functools

import jax
import jax.numpy as jnp
import numpy as np
from jax.experimental import pallas as pl
from jax.experimental.pallas import tpu as pltpu

EPS = 1e-5         # nn.InstanceNorm2d default eps
NEG_SLOPE = 0.2    # nn.LeakyReLU(0.2)


# ------------------------------------------------------------------------------------
# Wrapper-side weight preparation (plain JAX / numpy, runs once under jit).
# ------------------------------------------------------------------------------------
def _col_band_map(W):
    """(W, 3, W) 0/1 map: M[x, dx, xin] = 1 iff reflect(x - 1 + dx) == xin."""
    m = np.zeros((W, 3, W), np.float32)
    for x in range(W):
        for dx in range(3):
            xin = x - 1 + dx
            if xin < 0:
                xin = 1              # ReflectionPad2d(1): index -1 -> 1
            elif xin > W - 1:
                xin = W - 2          # index W -> W-2
            m[x, dx, xin] = 1.0
    return jnp.asarray(m)


def _banded_weights(w_hwio, W):
    """(3, 3, Cin, Cout) HWIO conv weights -> (3*W*Cin, W*Cout) stacked banded matrix.

    Row block dy holds bw[dy][xin*Cin + ci, x*Cout + co] = sum_{dx: reflect(x-1+dx)==xin}
    w[dy, dx, ci, co], i.e. the width-axis reflection padding is folded into the bands
    and the three dy bands are stacked along K so one matmul does the whole conv. [R3]
    """
    kh, kw, cin, cout = w_hwio.shape
    m = _col_band_map(W)                                   # (W, 3, W)
    bw = jnp.einsum("xdi,kdco->kicxo", m, w_hwio)          # (3, W, Cin, W, Cout)
    return bw.reshape(kh * W * cin, W * cout)              # (3*W*Cin, W*Cout)


def _channel_avg_matrix(H, W, C):
    """(W*C, W*C) matrix A with A[i, j] = [i % C == j % C] / (H*W).

    With per-image row sums s (B, W*C), (s @ A) is the per-channel spatial mean of
    each image already broadcast back onto every lane (fully lane-dense stats path).
    """
    lane = jnp.arange(W * C)
    same = (lane[:, None] % C) == (lane[None, :] % C)
    return same.astype(jnp.float32) / float(H * W)


def _pick_image_tile(N, H):
    """Images per grid step.  Want B*H >= 128 so each conv matmul fills the MXU rows;
    prefer >= 2 grid steps (v7x has 2 TensorCores) when that keeps B*H >= 128. [R1,R8]"""
    target = max(1, pl.cdiv(128, H))
    fitting = [d for d in range(1, N + 1) if N % d == 0 and d <= target]
    b = max(fitting) if fitting else 1
    if N // b < 2:
        alt = [d for d in fitting if N // d >= 2 and d * H >= 128]
        if alt:
            b = max(alt)
    return b


# ------------------------------------------------------------------------------------
# Fused kernel.
# ------------------------------------------------------------------------------------
def _make_kernel(B, H, WC, mxu_dtype):
    BH = B * H

    def leaky(t):
        return jnp.where(t > 0, t, NEG_SLOPE * t)

    def banded_conv(x, bw_ref, mask_top, mask_bot):
        # Row shifts via XLU rotations (positive shifts only); per-image reflection is
        # fixed with two lane-broadcast selects.  No scratch, no sublane-offset slices. [R2]
        down = pltpu.roll(x, 1, 0)           # row i <- row i-1 (wraps at row 0)
        up = pltpu.roll(x, BH - 1, 0)        # row i <- row i+1 (wraps at last row)
        row_m1 = jnp.where(mask_top, up, down)     # reflect: row -1 -> row 1
        row_p1 = jnp.where(mask_bot, down, up)     # reflect: row H  -> row H-2
        k = jnp.concatenate([row_m1, x, row_p1], axis=1)      # (BH, 3*WC), lane-dense
        return jnp.dot(k.astype(mxu_dtype), bw_ref[...],      # one K=3*WC MXU push [R3]
                       preferred_element_type=jnp.float32)

    def inst_norm(y, cavg):
        # Per-image, per-channel stats (biased var, matches nn.InstanceNorm2d).  Kept
        # fully in f32 (review correctness concern #2 / v5e note). [R4]
        y3 = y.reshape(B, H, WC)
        s1 = jnp.sum(y3, axis=1)                               # (B, WC)
        s2 = jnp.sum(y3 * y3, axis=1)                          # (B, WC)
        if B % 8 == 0:                                         # stacked stats matmul [R5]
            st = jnp.concatenate([s1, s2], axis=0)             # (2B, WC)
            m = jnp.dot(st, cavg, preferred_element_type=jnp.float32)
            mean, msq = m[:B], m[B:]
        else:
            mean = jnp.dot(s1, cavg, preferred_element_type=jnp.float32)
            msq = jnp.dot(s2, cavg, preferred_element_type=jnp.float32)
        var = jnp.maximum(msq - mean * mean, 0.0)
        inv = jax.lax.rsqrt(var + EPS)
        return ((y3 - mean[:, None, :]) * inv[:, None, :]).reshape(BH, WC)

    def kernel(x_ref, bw1_ref, bw2_ref, cavg_ref, o_ref):
        x = x_ref[...].astype(jnp.float32).reshape(BH, WC)     # (B*H, W*C) lane-dense [R1]
        cavg = cavg_ref[...]
        rows = jax.lax.broadcasted_iota(jnp.int32, (BH, WC), 0) % H   # hoisted once
        mask_top = rows == 0
        mask_bot = rows == H - 1
        # conv1 -> InstanceNorm -> LeakyReLU   (conv bias is cancelled by IN, affine=False)
        h = leaky(inst_norm(banded_conv(x, bw1_ref, mask_top, mask_bot), cavg))
        # conv2 -> InstanceNorm, + identity residual (exact f32 x), LeakyReLU
        y = inst_norm(banded_conv(h, bw2_ref, mask_top, mask_bot), cavg)
        o_ref[...] = leaky(y + x).reshape(B, H, WC).astype(o_ref.dtype)

    return kernel


# ------------------------------------------------------------------------------------
# Public wrappers.
# ------------------------------------------------------------------------------------
def residual_block_nhwc(x_nhwc, w1, b1, w2, b2, *, use_bf16_mxu=True):
    """Fused ResidualBlock forward on channel-last input (N, H, W, C).  [R6]

    w1, w2: (3, 3, Cin, Cout) HWIO.  b1, b2 are accepted for API parity but are a
    mathematical no-op: InstanceNorm2d (affine=False) subtracts the per-channel mean,
    which cancels the conv bias exactly.
    """
    del b1, b2
    N, H, W, C = x_nhwc.shape
    if w1.shape != (3, 3, C, C) or w2.shape != (3, 3, C, C):
        raise ValueError("only the default in_channels == out_channels, stride=1 config")
    if H % 8 != 0 or W < 2:
        raise ValueError("need H % 8 == 0 and W >= 2")

    WC = W * C
    B = _pick_image_tile(N, H)
    mxu_dtype = jnp.bfloat16 if use_bf16_mxu else jnp.float32   # [R4]

    x = x_nhwc.reshape(N, H, WC).astype(jnp.float32)
    bw1 = _banded_weights(w1, W).astype(mxu_dtype)              # (3*WC, WC)
    bw2 = _banded_weights(w2, W).astype(mxu_dtype)
    cavg = _channel_avg_matrix(H, W, C)                         # stays f32 (stats path)

    # True conv FLOPs (2 convs x 9 taps x Cin x Cout MACs per output pixel). [R10]
    flops = 2 * (2 * 9 * C * C) * N * H * W
    bytes_accessed = (2 * x.size * 4
                      + bw1.size * bw1.dtype.itemsize
                      + bw2.size * bw2.dtype.itemsize
                      + cavg.size * 4)

    out = pl.pallas_call(
        _make_kernel(B, H, WC, mxu_dtype),
        out_shape=jax.ShapeDtypeStruct((N, H, WC), jnp.float32),
        grid=(N // B,),
        in_specs=[
            pl.BlockSpec((B, H, WC), lambda n: (n, 0, 0)),       # B images / step [R1]
            pl.BlockSpec((3 * WC, WC), lambda n: (0, 0)),        # banded w1 (resident)
            pl.BlockSpec((3 * WC, WC), lambda n: (0, 0)),        # banded w2 (resident)
            pl.BlockSpec((WC, WC), lambda n: (0, 0)),            # channel-avg matrix
        ],
        out_specs=pl.BlockSpec((B, H, WC), lambda n: (n, 0, 0)),
        compiler_params=pltpu.CompilerParams(
            dimension_semantics=("parallel",),                   # shards steps across TCs
            vmem_limit_bytes=32 * 1024 * 1024,                   # fits v7x's 64 MiB [R7]
        ),
        cost_estimate=pl.CostEstimate(
            flops=flops, transcendentals=2 * N * WC, bytes_accessed=bytes_accessed),
    )(x, bw1, bw2, cavg)

    return out.reshape(N, H, W, C)


def residual_block(x_nchw, w1, b1, w2, b2, *, use_bf16_mxu=True):
    """NCHW parity wrapper for the PyTorch module.  The two transposes cost an extra
    HBM round trip of x/out; call residual_block_nhwc directly when the surrounding
    graph is already channel-last.  [R6]"""
    x = jnp.transpose(x_nchw, (0, 2, 3, 1))
    out = residual_block_nhwc(x, w1, b1, w2, b2, use_bf16_mxu=use_bf16_mxu)
    return jnp.transpose(out, (0, 3, 1, 2))


# -------------------- pure-JAX reference (for sanity check) --------------------
def _ref_forward(x_nchw, w1, b1, w2, b2):
    def conv_in(x, w, b):
        xp = jnp.pad(x, ((0, 0), (0, 0), (1, 1), (1, 1)), mode="reflect")
        w_oihw = jnp.transpose(w, (3, 2, 0, 1))
        y = jax.lax.conv_general_dilated(
            xp, w_oihw, (1, 1), "VALID",
            dimension_numbers=("NCHW", "OIHW", "NCHW"))
        y = y + b.reshape(1, -1, 1, 1)
        mean = jnp.mean(y, axis=(2, 3), keepdims=True)
        var = jnp.mean((y - mean) ** 2, axis=(2, 3), keepdims=True)
        return (y - mean) * jax.lax.rsqrt(var + EPS)

    act = lambda t: jnp.where(t > 0, t, NEG_SLOPE * t)
    out = act(conv_in(x_nchw, w1, b1))
    out = conv_in(out, w2, b2)
    return act(out + x_nchw)


if __name__ == "__main__":
    # Default config: in_channels == out_channels, stride=1, attention=False.
    # C=8, W=16 -> W*C = 128 lanes; N=16, H=16 -> B=8 images/step (128-row matmuls)
    # and a 2-step grid (one step per v7x TensorCore).
    N, C, H, W = 16, 8, 16, 16

    key = jax.random.PRNGKey(0)
    k1, k2, k3, k4, kx = jax.random.split(key, 5)
    # Shapes match nn.Conv2d(C, C, 3) weights/bias, stored as HWIO for the kernel.
    w1 = 0.1 * jax.random.normal(k1, (3, 3, C, C), jnp.float32)
    b1 = 0.1 * jax.random.normal(k2, (C,), jnp.float32)
    w2 = 0.1 * jax.random.normal(k3, (3, 3, C, C), jnp.float32)
    b2 = 0.1 * jax.random.normal(k4, (C,), jnp.float32)
    x = jax.random.normal(kx, (N, C, H, W), jnp.float32)

    ref = _ref_forward(x, w1, b1, w2, b2)

    # f32 MXU path: validates the structural math (rolls, banding, IN) at tight tolerance.
    f32_fn = jax.jit(functools.partial(residual_block, use_bf16_mxu=False))
    out_f32 = jax.block_until_ready(f32_fn(x, w1, b1, w2, b2))
    assert out_f32.shape == (N, C, H, W)
    assert jnp.allclose(out_f32, ref, atol=5e-4, rtol=5e-4), "f32 path mismatch vs reference"

    # Default bf16-operand MXU path (f32 accumulation + f32 InstanceNorm/epilogue):
    # small, expected bf16 rounding drift.
    bf16_fn = jax.jit(residual_block)
    out_bf16 = jax.block_until_ready(bf16_fn(x, w1, b1, w2, b2))
    assert out_bf16.shape == (N, C, H, W)
    assert jnp.allclose(out_bf16, ref, atol=2e-2, rtol=2e-2), "bf16 path mismatch vs reference"

    print("KERNEL_OK")
</pallas_src>

<mosaic_0001>
module attributes {stable_mosaic.version = 11 : i64} {
  func.func @kernel(%arg0: i32, %arg1: memref<8x16x128xf32, #tpu.memory_space<vmem>>, %arg2: memref<384x128xf32, #tpu.memory_space<vmem>>, %arg3: memref<384x128xf32, #tpu.memory_space<vmem>>, %arg4: memref<128x128xf32, #tpu.memory_space<vmem>>, %arg5: memref<8x16x128xf32, #tpu.memory_space<vmem>>) attributes {dimension_semantics = [#tpu.dimension_semantics<parallel>], iteration_bounds = array<i64: 2>, scalar_prefetch = 0 : i64, scratch_operands = 0 : i64, tpu.core_type = #tpu.core_type<tc>, window_params = [{transform_indices = @transform_0, window_bounds = array<i64: 8, 16, 128>}, {pipeline_mode = #tpu.pipeline_mode<synchronous>, transform_indices = @transform_1, window_bounds = array<i64: 384, 128>}, {pipeline_mode = #tpu.pipeline_mode<synchronous>, transform_indices = @transform_2, window_bounds = array<i64: 384, 128>}, {pipeline_mode = #tpu.pipeline_mode<synchronous>, transform_indices = @transform_3, window_bounds = array<i64: 128, 128>}, {transform_indices = @transform_4, window_bounds = array<i64: 8, 16, 128>}]} {
    %c0 = arith.constant 0 : index
    %c0_0 = arith.constant 0 : index
    %c0_1 = arith.constant 0 : index
    %0 = vector.load %arg1[%c0, %c0_0, %c0_1] : memref<8x16x128xf32, #tpu.memory_space<vmem>>, vector<8x16x128xf32>
    %1 = vector.shape_cast %0 : vector<8x16x128xf32> to vector<128x128xf32>
    %c0_2 = arith.constant 0 : index
    %c0_3 = arith.constant 0 : index
    %2 = vector.load %arg4[%c0_2, %c0_3] : memref<128x128xf32, #tpu.memory_space<vmem>>, vector<128x128xf32>
    %3 = tpu.iota {dimensions = array<i32: 0>} : vector<128x128xi32>
    %c16_i32 = arith.constant 16 : i32
    %c0_i32 = arith.constant 0 : i32
    %4 = arith.cmpi eq, %c16_i32, %c0_i32 : i32
    %c1_i32 = arith.constant 1 : i32
    %5 = arith.select %4, %c1_i32, %c16_i32 : i32
    %6 = vector.broadcast %5 : i32 to vector<128x128xi32>
    %7 = arith.remsi %3, %6 : vector<128x128xi32>
    %c0_i32_4 = arith.constant 0 : i32
    %8 = vector.broadcast %c0_i32_4 : i32 to vector<128x128xi32>
    %9 = arith.cmpi ne, %7, %8 : vector<128x128xi32>
    %c0_i32_5 = arith.constant 0 : i32
    %10 = vector.broadcast %c0_i32_5 : i32 to vector<128x128xi32>
    %11 = arith.cmpi slt, %7, %10 : vector<128x128xi32>
    %c0_i32_6 = arith.constant 0 : i32
    %12 = arith.cmpi slt, %5, %c0_i32_6 : i32
    %13 = vector.broadcast %12 : i1 to vector<128x128xi1>
    %14 = vector.broadcast %13 : vector<128x128xi1> to vector<128x128xi1>
    %15 = arith.xori %11, %14 : vector<128x128xi1>
    %16 = arith.andi %15, %9 : vector<128x128xi1>
    %17 = vector.broadcast %5 : i32 to vector<128x128xi32>
    %18 = arith.addi %7, %17 : vector<128x128xi32>
    %19 = arith.select %16, %18, %7 : vector<128x128xi1>, vector<128x128xi32>
    %c0_i32_7 = arith.constant 0 : i32
    %20 = vector.broadcast %c0_i32_7 : i32 to vector<128x128xi32>
    %21 = arith.cmpi eq, %19, %20 : vector<128x128xi32>
    %c15_i32 = arith.constant 15 : i32
    %22 = vector.broadcast %c15_i32 : i32 to vector<128x128xi32>
    %23 = arith.cmpi eq, %19, %22 : vector<128x128xi32>
    %c1_i32_8 = arith.constant 1 : i32
    %24 = tpu.dynamic_rotate %1 by %c1_i32_8 dim 0 : vector<128x128xf32>, i32 -> vector<128x128xf32>
    %c127_i32 = arith.constant 127 : i32
    %25 = tpu.dynamic_rotate %1 by %c127_i32 dim 0 : vector<128x128xf32>, i32 -> vector<128x128xf32>
    %26 = arith.select %21, %25, %24 : vector<128x128xi1>, vector<128x128xf32>
    %27 = arith.select %23, %24, %25 : vector<128x128xi1>, vector<128x128xf32>
    %28 = tpu.concatenate %26, %1, %27 in 1 : vector<128x128xf32>, vector<128x128xf32>, vector<128x128xf32> -> vector<128x384xf32>
    %c0_9 = arith.constant 0 : index
    %c0_10 = arith.constant 0 : index
    %29 = vector.load %arg2[%c0_9, %c0_10] : memref<384x128xf32, #tpu.memory_space<vmem>>, vector<384x128xf32>
    %cst = arith.constant dense<0.000000e+00> : vector<128x128xf32>
    %30 = tpu.matmul %28, %29, %cst {dimension_numbers = #tpu.dot_dimension_numbers<[1], [0], [0], [1], [0, 0, 1, 1], [], []>} : vector<128x384xf32>, vector<384x128xf32>, vector<128x128xf32> -> vector<128x128xf32>
    %31 = vector.shape_cast %30 : vector<128x128xf32> to vector<8x16x128xf32>
    %cst_11 = arith.constant dense<0.000000e+00> : vector<8x128xf32>
    %32 = vector.multi_reduction <add>, %31, %cst_11 [1] : vector<8x16x128xf32> to vector<8x128xf32>
    %33 = arith.mulf %31, %31 : vector<8x16x128xf32>
    %cst_12 = arith.constant dense<0.000000e+00> : vector<8x128xf32>
    %34 = vector.multi_reduction <add>, %33, %cst_12 [1] : vector<8x16x128xf32> to vector<8x128xf32>
    %35 = tpu.concatenate %32, %34 in 0 : vector<8x128xf32>, vector<8x128xf32> -> vector<16x128xf32>
    %cst_13 = arith.constant dense<0.000000e+00> : vector<16x128xf32>
    %36 = tpu.matmul %35, %2, %cst_13 {dimension_numbers = #tpu.dot_dimension_numbers<[1], [0], [0], [1], [0, 0, 1, 1], [], []>} : vector<16x128xf32>, vector<128x128xf32>, vector<16x128xf32> -> vector<16x128xf32>
    %37 = vector.extract_strided_slice %36 {offsets = [0, 0], sizes = [8, 128], strides = [1, 1]} : vector<16x128xf32> to vector<8x128xf32>
    %38 = vector.extract_strided_slice %36 {offsets = [8, 0], sizes = [8, 128], strides = [1, 1]} : vector<16x128xf32> to vector<8x128xf32>
    %39 = arith.mulf %37, %37 : vector<8x128xf32>
    %40 = arith.subf %38, %39 : vector<8x128xf32>
    %cst_14 = arith.constant 0.000000e+00 : f32
    %41 = vector.broadcast %cst_14 : f32 to vector<8x128xf32>
    %42 = arith.maximumf %40, %41 : vector<8x128xf32>
    %cst_15 = arith.constant 9.99999974E-6 : f32
    %43 = vector.broadcast %cst_15 : f32 to vector<8x128xf32>
    %44 = arith.addf %42, %43 : vector<8x128xf32>
    %45 = math.rsqrt %44 : vector<8x128xf32>
    %46 = vector.shape_cast %37 : vector<8x128xf32> to vector<8x1x128xf32>
    %47 = vector.broadcast %46 : vector<8x1x128xf32> to vector<8x16x128xf32>
    %48 = arith.subf %31, %47 : vector<8x16x128xf32>
    %49 = vector.shape_cast %45 : vector<8x128xf32> to vector<8x1x128xf32>
    %50 = vector.broadcast %49 : vector<8x1x128xf32> to vector<8x16x128xf32>
    %51 = arith.mulf %48, %50 : vector<8x16x128xf32>
    %52 = vector.shape_cast %51 : vector<8x16x128xf32> to vector<128x128xf32>
    %cst_16 = arith.constant 0.000000e+00 : f32
    %53 = vector.broadcast %cst_16 : f32 to vector<128x128xf32>
    %54 = arith.cmpf ogt, %52, %53 : vector<128x128xf32>
    %cst_17 = arith.constant 2.000000e-01 : f32
    %55 = vector.broadcast %cst_17 : f32 to vector<128x128xf32>
    %56 = arith.mulf %55, %52 : vector<128x128xf32>
    %57 = arith.select %54, %52, %56 : vector<128x128xi1>, vector<128x128xf32>
    %c1_i32_18 = arith.constant 1 : i32
    %58 = tpu.dynamic_rotate %57 by %c1_i32_18 dim 0 : vector<128x128xf32>, i32 -> vector<128x128xf32>
    %c127_i32_19 = arith.constant 127 : i32
    %59 = tpu.dynamic_rotate %57 by %c127_i32_19 dim 0 : vector<128x128xf32>, i32 -> vector<128x128xf32>
    %60 = arith.select %21, %59, %58 : vector<128x128xi1>, vector<128x128xf32>
    %61 = arith.select %23, %58, %59 : vector<128x128xi1>, vector<128x128xf32>
    %62 = tpu.concatenate %60, %57, %61 in 1 : vector<128x128xf32>, vector<128x128xf32>, vector<128x128xf32> -> vector<128x384xf32>
    %c0_20 = arith.constant 0 : index
    %c0_21 = arith.constant 0 : index
    %63 = vector.load %arg3[%c0_20, %c0_21] : memref<384x128xf32, #tpu.memory_space<vmem>>, vector<384x128xf32>
    %cst_22 = arith.constant dense<0.000000e+00> : vector<128x128xf32>
    %64 = tpu.matmul %62, %63, %cst_22 {dimension_numbers = #tpu.dot_dimension_numbers<[1], [0], [0], [1], [0, 0, 1, 1], [], []>} : vector<128x384xf32>, vector<384x128xf32>, vector<128x128xf32> -> vector<128x128xf32>
    %65 = vector.shape_cast %64 : vector<128x128xf32> to vector<8x16x128xf32>
    %cst_23 = arith.constant dense<0.000000e+00> : vector<8x128xf32>
    %66 = vector.multi_reduction <add>, %65, %cst_23 [1] : vector<8x16x128xf32> to vector<8x128xf32>
    %67 = arith.mulf %65, %65 : vector<8x16x128xf32>
    %cst_24 = arith.constant dense<0.000000e+00> : vector<8x128xf32>
    %68 = vector.multi_reduction <add>, %67, %cst_24 [1] : vector<8x16x128xf32> to vector<8x128xf32>
    %69 = tpu.concatenate %66, %68 in 0 : vector<8x128xf32>, vector<8x128xf32> -> vector<16x128xf32>
    %cst_25 = arith.constant dense<0.000000e+00> : vector<16x128xf32>
    %70 = tpu.matmul %69, %2, %cst_25 {dimension_numbers = #tpu.dot_dimension_numbers<[1], [0], [0], [1], [0, 0, 1, 1], [], []>} : vector<16x128xf32>, vector<128x128xf32>, vector<16x128xf32> -> vector<16x128xf32>
    %71 = vector.extract_strided_slice %70 {offsets = [0, 0], sizes = [8, 128], strides = [1, 1]} : vector<16x128xf32> to vector<8x128xf32>
    %72 = vector.extract_strided_slice %70 {offsets = [8, 0], sizes = [8, 128], strides = [1, 1]} : vector<16x128xf32> to vector<8x128xf32>
    %73 = arith.mulf %71, %71 : vector<8x128xf32>
    %74 = arith.subf %72, %73 : vector<8x128xf32>
    %cst_26 = arith.constant 0.000000e+00 : f32
    %75 = vector.broadcast %cst_26 : f32 to vector<8x128xf32>
    %76 = arith.maximumf %74, %75 : vector<8x128xf32>
    %cst_27 = arith.constant 9.99999974E-6 : f32
    %77 = vector.broadcast %cst_27 : f32 to vector<8x128xf32>
    %78 = arith.addf %76, %77 : vector<8x128xf32>
    %79 = math.rsqrt %78 : vector<8x128xf32>
    %80 = vector.shape_cast %71 : vector<8x128xf32> to vector<8x1x128xf32>
    %81 = vector.broadcast %80 : vector<8x1x128xf32> to vector<8x16x128xf32>
    %82 = arith.subf %65, %81 : vector<8x16x128xf32>
    %83 = vector.shape_cast %79 : vector<8x128xf32> to vector<8x1x128xf32>
    %84 = vector.broadcast %83 : vector<8x1x128xf32> to vector<8x16x128xf32>
    %85 = arith.mulf %82, %84 : vector<8x16x128xf32>
    %86 = vector.shape_cast %85 : vector<8x16x128xf32> to vector<128x128xf32>
    %87 = arith.addf %86, %1 : vector<128x128xf32>
    %cst_28 = arith.constant 0.000000e+00 : f32
    %88 = vector.broadcast %cst_28 : f32 to vector<128x128xf32>
    %89 = arith.cmpf ogt, %87, %88 : vector<128x128xf32>
    %cst_29 = arith.constant 2.000000e-01 : f32
    %90 = vector.broadcast %cst_29 : f32 to vector<128x128xf32>
    %91 = arith.mulf %90, %87 : vector<128x128xf32>
    %92 = arith.select %89, %87, %91 : vector<128x128xi1>, vector<128x128xf32>
    %93 = vector.shape_cast %92 : vector<128x128xf32> to vector<8x16x128xf32>
    %c0_30 = arith.constant 0 : index
    %c0_31 = arith.constant 0 : index
    %c0_32 = arith.constant 0 : index
    %94 = vector.load %arg5[%c0_30, %c0_31, %c0_32] : memref<8x16x128xf32, #tpu.memory_space<vmem>>, vector<8x16x128xf32>
    tpu.vector_store %arg5[%c0_30, %c0_31, %c0_32], %93 {strides = array<i32>} : memref<8x16x128xf32, #tpu.memory_space<vmem>>, vector<8x16x128xf32>,
    return
  }
  func.func @transform_0(%arg0: i32) -> (i32, i32, i32) {
    %c0_i32 = arith.constant 0 : i32
    %c0_i32_0 = arith.constant 0 : i32
    %c0_i32_1 = arith.constant 0 : i32
    return %arg0, %c0_i32, %c0_i32_0 : i32, i32, i32
  }
  func.func @transform_1(%arg0: i32) -> (i32, i32) {
    %c0_i32 = arith.constant 0 : i32
    %c0_i32_0 = arith.constant 0 : i32
    %c0_i32_1 = arith.constant 0 : i32
    return %c0_i32, %c0_i32_0 : i32, i32
  }
  func.func @transform_2(%arg0: i32) -> (i32, i32) {
    %c0_i32 = arith.constant 0 : i32
    %c0_i32_0 = arith.constant 0 : i32
    %c0_i32_1 = arith.constant 0 : i32
    return %c0_i32, %c0_i32_0 : i32, i32
  }
  func.func @transform_3(%arg0: i32) -> (i32, i32) {
    %c0_i32 = arith.constant 0 : i32
    %c0_i32_0 = arith.constant 0 : i32
    %c0_i32_1 = arith.constant 0 : i32
    return %c0_i32, %c0_i32_0 : i32, i32
  }
  func.func @transform_4(%arg0: i32) -> (i32, i32, i32) {
    %c0_i32 = arith.constant 0 : i32
    %c0_i32_0 = arith.constant 0 : i32
    %c0_i32_1 = arith.constant 0 : i32
    return %arg0, %c0_i32, %c0_i32_0 : i32, i32, i32
  }
}

</mosaic_0001>

<llo_original>
// kernel: residual_block.1
$region0: #{residual_block.1}
  #allocation0 [shape = 'u32[]', space=smem, size = 0x4, offset = 0x4, fixed_abs, tag = 'smem constant byte address 0x4 - core index']
  #allocation1 [shape = 'u32[144,128]{1,0:T(1,128)}', space=vmem, size = 0x12000, scoped, tag = 'internal scratch']
  %s0 = inlined_call_operand.vmem [shape: f32[16,16,128], index: 0, kind: input, shape index: {}]
  %s1 = inlined_call_operand.vmem [shape: f32[384,128], index: 1, kind: input, shape index: {}]
  %s2 = inlined_call_operand.vmem [shape: f32[384,128], index: 2, kind: input, shape index: {}]
  %s3 = inlined_call_operand.vmem [shape: f32[128,128], index: 3, kind: input, shape index: {}]
  %s4 = inlined_call_operand.vmem [shape: f32[16,16,128], index: 4, kind: output, shape index: {}]
  %s5 = sld [smem:[#allocation0]]
  $region49: #{residual_block.1} parent=0
    _
  %s7 = ssub.s32 1, %s5
  %s8 = scalar_select 0, %s7, %s5
  loop: start=0, step=1, limit=4
  $region2: #{residual_block.1} parent=0 // loop_pre_header
    _
  $region3: #{residual_block.1} parent=0 // loop_header
    %s10 = sphi 0, %s14
    %p11 = scmp.ge.s32.totalorder %s10, 4
    %s20 = sphi 0, %s22
    %s23 = sphi 0, %s20
    %s24 = sphi 0, %s23
    %s40 = sphi 0, %s24
    %s44 = sphi 0, %s44
    %s46 = sphi 0, %s44
    %s47 = sphi 0, %s46
    %s61 = sphi 0, %s47
    %s65 = sphi 0, %s65
    %s67 = sphi 0, %s65
    %s68 = sphi 0, %s67
    %s82 = sphi 0, %s68
    %s86 = sphi 0, %s86
    %s88 = sphi 0, %s86
    %s89 = sphi 0, %s88
    %s103 = sphi 0, %s89
    %s109 = sphi 0, %s111
    %s112 = sphi 0, %s109
    %s113 = sphi 0, %s112
    %s129 = sphi 0, %s113
  $region4: #{residual_block.1} parent=0 // loop_header_branch
    %13 = sbr.rel (%p11) target = $region8
  $region5: #{residual_block.1} parent=0 // loop_body
    %s15 = ssub.s32 %s10, 1
    %s16 = ssub.s32 %s10, 2
    %s17 = sadd.s32 %s10, 1
    %s18 = ssub.s32 %s10, %s17
    %p19 = scmp.eq.s32.totalorder %s18, 0
    %s21 = sadd.s32 %s20, 1
    %s22 = scalar_select %p19, %s20, %s21
    %p25 = pneg %p19
    %p26 = scmp.eq.s32.totalorder %s10, 1
    %p27 = por %p25, %p26
    %p28 = scmp.ne.s32.totalorder %s20, %s23
    %p29 = scmp.eq.s32.totalorder %s10, 0
    %p30 = por %p28, %p29
    %p31 = scmp.ne.s32.totalorder %s20, %s23
    %p32 = scmp.eq.s32.totalorder %s15, 1
    %p33 = por %p31, %p32
    %p34 = scmp.ne.s32.totalorder %s23, %s24
    %p35 = scmp.eq.s32.totalorder %s15, 0
    %p36 = por %p34, %p35
    %p37 = scmp.ne.s32.totalorder %s23, %s24
    %p38 = scmp.eq.s32.totalorder %s16, 1
    %p39 = por %p37, %p38
    %p41 = scmp.ne.s32.totalorder %s24, %s40
    %p42 = scmp.eq.s32.totalorder %s16, 0
    %p43 = por %p41, %p42
    %s45 = sadd.s32 %s44, 1
    %p48 = scmp.eq.s32.totalorder %s10, 1
    %p49 = scmp.ne.s32.totalorder %s44, %s46
    %p50 = scmp.eq.s32.totalorder %s10, 0
    %p51 = por %p49, %p50
    %p52 = scmp.ne.s32.totalorder %s44, %s46
    %p53 = scmp.eq.s32.totalorder %s15, 1
    %p54 = por %p52, %p53
    %p55 = scmp.ne.s32.totalorder %s46, %s47
    %p56 = scmp.eq.s32.totalorder %s15, 0
    %p57 = por %p55, %p56
    %p58 = scmp.ne.s32.totalorder %s46, %s47
    %p59 = scmp.eq.s32.totalorder %s16, 1
    %p60 = por %p58, %p59
    %p62 = scmp.ne.s32.totalorder %s47, %s61
    %p63 = scmp.eq.s32.totalorder %s16, 0
    %p64 = por %p62, %p63
    %s66 = sadd.s32 %s65, 1
    %p69 = scmp.eq.s32.totalorder %s10, 1
    %p70 = scmp.ne.s32.totalorder %s65, %s67
    %p71 = scmp.eq.s32.totalorder %s10, 0
    %p72 = por %p70, %p71
    %p73 = scmp.ne.s32.totalorder %s65, %s67
    %p74 = scmp.eq.s32.totalorder %s15, 1
    %p75 = por %p73, %p74
    %p76 = scmp.ne.s32.totalorder %s67, %s68
    %p77 = scmp.eq.s32.totalorder %s15, 0
    %p78 = por %p76, %p77
    %p79 = scmp.ne.s32.totalorder %s67, %s68
    %p80 = scmp.eq.s32.totalorder %s16, 1
    %p81 = por %p79, %p80
    %p83 = scmp.ne.s32.totalorder %s68, %s82
    %p84 = scmp.eq.s32.totalorder %s16, 0
    %p85 = por %p83, %p84
    %s87 = sadd.s32 %s86, 1
    %p90 = scmp.eq.s32.totalorder %s10, 1
    %p91 = scmp.ne.s32.totalorder %s86, %s88
    %p92 = scmp.eq.s32.totalorder %s10, 0
    %p93 = por %p91, %p92
    %p94 = scmp.ne.s32.totalorder %s86, %s88
    %p95 = scmp.eq.s32.totalorder %s15, 1
    %p96 = por %p94, %p95
    %p97 = scmp.ne.s32.totalorder %s88, %s89
    %p98 = scmp.eq.s32.totalorder %s15, 0
    %p99 = por %p97, %p98
    %p100 = scmp.ne.s32.totalorder %s88, %s89
    %p101 = scmp.eq.s32.totalorder %s16, 1
    %p102 = por %p100, %p101
    %p104 = scmp.ne.s32.totalorder %s89, %s103
    %p105 = scmp.eq.s32.totalorder %s16, 0
    %p106 = por %p104, %p105
    %s107 = ssub.s32 %s10, %s17
    %p108 = scmp.eq.s32.totalorder %s107, 0
    %s110 = sadd.s32 %s109, 1
    %s111 = scalar_select %p108, %s109, %s110
    %p114 = pneg %p108
    %p115 = scmp.eq.s32.totalorder %s10, 1
    %p116 = por %p114, %p115
    %p117 = scmp.ne.s32.totalorder %s109, %s112
    %p118 = scmp.eq.s32.totalorder %s10, 0
    %p119 = por %p117, %p118
    %p120 = scmp.ne.s32.totalorder %s109, %s112
    %p121 = scmp.eq.s32.totalorder %s15, 1
    %p122 = por %p120, %p121
    %p123 = scmp.ne.s32.totalorder %s112, %s113
    %p124 = scmp.eq.s32.totalorder %s15, 0
    %p125 = por %p123, %p124
    %p126 = scmp.ne.s32.totalorder %s112, %s113
    %p127 = scmp.eq.s32.totalorder %s16, 1
    %p128 = por %p126, %p127
    %p130 = scmp.ne.s32.totalorder %s113, %s129
    %p131 = scmp.eq.s32.totalorder %s16, 0
    %p132 = por %p130, %p131
    %p133 = scmp.le.s32.totalorder 1, %s10
    %p134 = scmp.lt.s32.totalorder %s10, 3
    %p135 = pnand %p133, %p134
    %p136 = pneg %p135
    // Predicated region
    $region9: #{residual_block.1} parent=5 // pred_check
      _
    $region10: #{residual_block.1} parent=5 // pred_check_branch
      %138 = sbr.rel (%p135) target = $region12
    $region11: #{residual_block.1} parent=5 // pred_region
      %s139 = ssub.s32 %s10, 1
      // Predicated region
      $region13: #{residual_block.1} parent=11 // pred_check
        %p140 = pneg %p57
      $region14: #{residual_block.1} parent=11 // pred_check_branch
        %142 = sbr.rel (%p140) target = $region16
      $region15: #{residual_block.1} parent=11 // pred_region
        _
      $region16: #{residual_block.1} parent=11 // pred_fallthru
        _
      // Predicated region
      $region17: #{residual_block.1} parent=11 // pred_check
        %p143 = pneg %p78
      $region18: #{residual_block.1} parent=11 // pred_check_branch
        %145 = sbr.rel (%p143) target = $region20
      $region19: #{residual_block.1} parent=11 // pred_region
        _
      $region20: #{residual_block.1} parent=11 // pred_fallthru
        _
      // Predicated region
      $region21: #{residual_block.1} parent=11 // pred_check
        %p146 = pneg %p99
      $region22: #{residual_block.1} parent=11 // pred_check_branch
        %148 = sbr.rel (%p146) target = $region24
      $region23: #{residual_block.1} parent=11 // pred_region
        _
      $region24: #{residual_block.1} parent=11 // pred_fallthru
        _
    $region12: #{residual_block.1} parent=5 // pred_fallthru
      _
    %p149 = scmp.lt.s32.totalorder %s10, 2
    // Predicated region
    $region25: #{residual_block.1} parent=5 // pred_check
      %p150 = pneg %p149
    $region26: #{residual_block.1} parent=5 // pred_check_branch
      %152 = sbr.rel (%p150) target = $region28
    $region27: #{residual_block.1} parent=5 // pred_region
      // Predicated region
      $region29: #{residual_block.1} parent=27 // pred_check
        %p153 = pneg %p30
      $region30: #{residual_block.1} parent=27 // pred_check_branch
        %155 = sbr.rel (%p153) target = $region32
      $region31: #{residual_block.1} parent=27 // pred_region
        %s156 = smul.u32 8, %s10
        %p157 = scmp.lt.s32.totalorder %s156, 15
        %s158 = scalar_select %p157, %s156, 15
        %s159 = smul.addr %s158, 2
        %s160 = smul.addr %s159, 8
        %s161 = scalar_lea.vmem %s0, %s160
        %s162 = smul.u32 8, %s10
      $region32: #{residual_block.1} parent=27 // pred_fallthru
        _
    $region28: #{residual_block.1} parent=5 // pred_fallthru
      _
    %p163 = scmp.le.s32.totalorder 1, %s10
    %p164 = scmp.lt.s32.totalorder %s10, 3
    %p165 = pnand %p163, %p164
    %p166 = pneg %p165
    // Predicated region
    $region33: #{residual_block.1} parent=5 // pred_check
      _
    $region34: #{residual_block.1} parent=5 // pred_check_branch
      %168 = sbr.rel (%p165) target = $region36
    $region35: #{residual_block.1} parent=5 // pred_region
      %s169 = ssub.s32 %s10, 1
      %s170 = smul.u32 8, %s15
      %p171 = scmp.lt.s32.totalorder %s170, 15
      %s172 = scalar_select %p171, %s170, 15
      %s173 = smul.addr %s172, 2
      %s174 = smul.addr %s173, 8
      %s175 = scalar_lea.vmem %s0, %s174
      %p176 = pneg %p36
      %p177 = pneg %p33
      %p178 = pneg %p57
      %p179 = pneg %p54
      %p180 = pneg %p78
      %p181 = pneg %p75
      %p182 = pneg %p99
      %p183 = pneg %p96
      %p184 = pneg %p125
      %p185 = pneg %p122
      %s186 = smul.u32 8, %s15
      %p187 = scmp.lt.s32.totalorder %s186, 15
      %s188 = scalar_select %p187, %s186, 15
      %s189 = smul.addr %s188, 2
      %s190 = smul.addr %s189, 8
      %s191 = scalar_lea.vmem %s4, %s190
      %s192 = smul.u32 8, %s15
      %p193 = scmp.lt.s32.totalorder %s192, 15
      %s194 = scalar_select %p193, %s192, 15
      %s195 = smul.addr %s194, 2
      %s196 = smul.addr %s195, 8
      %s197 = scalar_lea.vmem %s0, %s196
      %s198 = smul.u32 8, %s15
      %s199 = smul.u32 8, %s15
      %p200 = scmp.lt.s32.totalorder %s199, 15
      %s201 = scalar_select %p200, %s199, 15
      %s202 = smul.addr %s201, 2
      %s203 = smul.addr %s202, 8
      %s204 = scalar_lea.vmem %s4, %s203
      %s205 = smul.u32 8, %s15
      %v206 = vld [vmem:[%s197] sm:$0xff]
      %v207 = vld [vmem:[%s197 + $0x8] sm:$0xff]
      %v208 = vld [vmem:[%s197 + $0x10] sm:$0xff]
      %v209 = vld [vmem:[%s197 + $0x18] sm:$0xff]
      %v210 = vld [vmem:[%s197 + $0x20] sm:$0xff]
      %v211 = vld [vmem:[%s197 + $0x28] sm:$0xff]
      %v212 = vld [vmem:[%s197 + $0x30] sm:$0xff]
      %v213 = vld [vmem:[%s197 + $0x38] sm:$0xff]
      %v214 = vld [vmem:[%s197 + $0x40] sm:$0xff]
      %v215 = vld [vmem:[%s197 + $0x48] sm:$0xff]
      %v216 = vld [vmem:[%s197 + $0x50] sm:$0xff]
      %v217 = vld [vmem:[%s197 + $0x58] sm:$0xff]
      %v218 = vld [vmem:[%s197 + $0x60] sm:$0xff]
      %v219 = vld [vmem:[%s197 + $0x68] sm:$0xff]
      %v220 = vld [vmem:[%s197 + $0x70] sm:$0xff]
      %v221 = vld [vmem:[%s197 + $0x78] sm:$0xff]
      %v222 = vld [vmem:[%s3] sm:$0xff]
      %v223 = vld [vmem:[%s3 + $0x8] sm:$0xff]
      %v224 = vld [vmem:[%s3 + $0x10] sm:$0xff]
      %v225 = vld [vmem:[%s3 + $0x18] sm:$0xff]
      %v226 = vld [vmem:[%s3 + $0x20] sm:$0xff]
      %v227 = vld [vmem:[%s3 + $0x28] sm:$0xff]
      %v228 = vld [vmem:[%s3 + $0x30] sm:$0xff]
      %v229 = vld [vmem:[%s3 + $0x38] sm:$0xff]
      %v230 = vld [vmem:[%s3 + $0x40] sm:$0xff]
      %v231 = vld [vmem:[%s3 + $0x48] sm:$0xff]
      %v232 = vld [vmem:[%s3 + $0x50] sm:$0xff]
      %v233 = vld [vmem:[%s3 + $0x58] sm:$0xff]
      %v234 = vld [vmem:[%s3 + $0x60] sm:$0xff]
      %v235 = vld [vmem:[%s3 + $0x68] sm:$0xff]
      %v236 = vld [vmem:[%s3 + $0x70] sm:$0xff]
      %v237 = vld [vmem:[%s3 + $0x78] sm:$0xff]
      %v238 = vlaneseq
      %v239 = vshrl.u32 %v238, 7
      %v240 = vadd.s32 %v239, 8
      %v241 = vadd.s32 %v239, 16
      %v242 = vadd.s32 %v239, 24
      %v243 = vadd.s32 %v239, 32
      %v244 = vadd.s32 %v239, 40
      %v245 = vadd.s32 %v239, 48
      %v246 = vadd.s32 %v239, 56
      %v247 = vadd.s32 %v239, 64
      %v248 = vadd.s32 %v239, 72
      %v249 = vadd.s32 %v239, 80
      %v250 = vadd.s32 %v239, 88
      %v251 = vadd.s32 %v239, 96
      %v252 = vadd.s32 %v239, 104
      %v253 = vadd.s32 %v239, 112
      %v254 = vadd.s32 %v239, 120
      %vm255 = vcmp.lt.s32.totalorder %v239, 0
      %v256 = vsub.s32 0, %v239
      %v257 = vsel %vm255, %v256, %v239
      %v258 = vshrl.u32 %v257, 4
      %v259 = vand.u32 %v257, 15
      %v260 = vsub.s32 0, %v259
      %v261 = vsel %vm255, %v260, %v259
      %vm262 = vcmp.lt.s32.totalorder %v240, 0
      %v263 = vsub.s32 0, %v240
      %v264 = vsel %vm262, %v263, %v240
      %v265 = vshrl.u32 %v264, 4
      %v266 = vand.u32 %v264, 15
      %v267 = vsub.s32 0, %v266
      %v268 = vsel %vm262, %v267, %v266
      %vm269 = vcmp.lt.s32.totalorder %v241, 0
      %v270 = vsub.s32 0, %v241
      %v271 = vsel %vm269, %v270, %v241
      %v272 = vshrl.u32 %v271, 4
      %v273 = vand.u32 %v271, 15
      %v274 = vsub.s32 0, %v273
      %v275 = vsel %vm269, %v274, %v273
      %vm276 = vcmp.lt.s32.totalorder %v242, 0
      %v277 = vsub.s32 0, %v242
      %v278 = vsel %vm276, %v277, %v242
      %v279 = vshrl.u32 %v278, 4
      %v280 = vand.u32 %v278, 15
      %v281 = vsub.s32 0, %v280
      %v282 = vsel %vm276, %v281, %v280
      %vm283 = vcmp.lt.s32.totalorder %v243, 0
      %v284 = vsub.s32 0, %v243
      %v285 = vsel %vm283, %v284, %v243
      %v286 = vshrl.u32 %v285, 4
      %v287 = vand.u32 %v285, 15
      %v288 = vsub.s32 0, %v287
      %v289 = vsel %vm283, %v288, %v287
      %vm290 = vcmp.lt.s32.totalorder %v244, 0
      %v291 = vsub.s32 0, %v244
      %v292 = vsel %vm290, %v291, %v244
      %v293 = vshrl.u32 %v292, 4
      %v294 = vand.u32 %v292, 15
      %v295 = vsub.s32 0, %v294
      %v296 = vsel %vm290, %v295, %v294
      %vm297 = vcmp.lt.s32.totalorder %v245, 0
      %v298 = vsub.s32 0, %v245
      %v299 = vsel %vm297, %v298, %v245
      %v300 = vshrl.u32 %v299, 4
      %v301 = vand.u32 %v299, 15
      %v302 = vsub.s32 0, %v301
      %v303 = vsel %vm297, %v302, %v301
      %vm304 = vcmp.lt.s32.totalorder %v246, 0
      %v305 = vsub.s32 0, %v246
      %v306 = vsel %vm304, %v305, %v246
      %v307 = vshrl.u32 %v306, 4
      %v308 = vand.u32 %v306, 15
      %v309 = vsub.s32 0, %v308
      %v310 = vsel %vm304, %v309, %v308
      %vm311 = vcmp.lt.s32.totalorder %v247, 0
      %v312 = vsub.s32 0, %v247
      %v313 = vsel %vm311, %v312, %v247
      %v314 = vshrl.u32 %v313, 4
      %v315 = vand.u32 %v313, 15
      %v316 = vsub.s32 0, %v315
      %v317 = vsel %vm311, %v316, %v315
      %vm318 = vcmp.lt.s32.totalorder %v248, 0
      %v319 = vsub.s32 0, %v248
      %v320 = vsel %vm318, %v319, %v248
      %v321 = vshrl.u32 %v320, 4
      %v322 = vand.u32 %v320, 15
      %v323 = vsub.s32 0, %v322
      %v324 = vsel %vm318, %v323, %v322
      %vm325 = vcmp.lt.s32.totalorder %v249, 0
      %v326 = vsub.s32 0, %v249
      %v327 = vsel %vm325, %v326, %v249
      %v328 = vshrl.u32 %v327, 4
      %v329 = vand.u32 %v327, 15
      %v330 = vsub.s32 0, %v329
      %v331 = vsel %vm325, %v330, %v329
      %vm332 = vcmp.lt.s32.totalorder %v250, 0
      %v333 = vsub.s32 0, %v250
      %v334 = vsel %vm332, %v333, %v250
      %v335 = vshrl.u32 %v334, 4
      %v336 = vand.u32 %v334, 15
      %v337 = vsub.s32 0, %v336
      %v338 = vsel %vm332, %v337, %v336
      %vm339 = vcmp.lt.s32.totalorder %v251, 0
      %v340 = vsub.s32 0, %v251
      %v341 = vsel %vm339, %v340, %v251
      %v342 = vshrl.u32 %v341, 4
      %v343 = vand.u32 %v341, 15
      %v344 = vsub.s32 0, %v343
      %v345 = vsel %vm339, %v344, %v343
      %vm346 = vcmp.lt.s32.totalorder %v252, 0
      %v347 = vsub.s32 0, %v252
      %v348 = vsel %vm346, %v347, %v252
      %v349 = vshrl.u32 %v348, 4
      %v350 = vand.u32 %v348, 15
      %v351 = vsub.s32 0, %v350
      %v352 = vsel %vm346, %v351, %v350
      %vm353 = vcmp.lt.s32.totalorder %v253, 0
      %v354 = vsub.s32 0, %v253
      %v355 = vsel %vm353, %v354, %v253
      %v356 = vshrl.u32 %v355, 4
      %v357 = vand.u32 %v355, 15
      %v358 = vsub.s32 0, %v357
      %v359 = vsel %vm353, %v358, %v357
      %vm360 = vcmp.lt.s32.totalorder %v254, 0
      %v361 = vsub.s32 0, %v254
      %v362 = vsel %vm360, %v361, %v254
      %v363 = vshrl.u32 %v362, 4
      %v364 = vand.u32 %v362, 15
      %v365 = vsub.s32 0, %v364
      %v366 = vsel %vm360, %v365, %v364
      %vm367 = vcmp.ne.s32.totalorder %v261, 0
      %vm368 = vcmp.ne.s32.totalorder %v268, 0
      %vm369 = vcmp.ne.s32.totalorder %v275, 0
      %vm370 = vcmp.ne.s32.totalorder %v282, 0
      %vm371 = vcmp.ne.s32.totalorder %v289, 0
      %vm372 = vcmp.ne.s32.totalorder %v296, 0
      %vm373 = vcmp.ne.s32.totalorder %v303, 0
      %vm374 = vcmp.ne.s32.totalorder %v310, 0
      %vm375 = vcmp.ne.s32.totalorder %v317, 0
      %vm376 = vcmp.ne.s32.totalorder %v324, 0
      %vm377 = vcmp.ne.s32.totalorder %v331, 0
      %vm378 = vcmp.ne.s32.totalorder %v338, 0
      %vm379 = vcmp.ne.s32.totalorder %v345, 0
      %vm380 = vcmp.ne.s32.totalorder %v352, 0
      %vm381 = vcmp.ne.s32.totalorder %v359, 0
      %vm382 = vcmp.ne.s32.totalorder %v366, 0
      %vm383 = vcmp.lt.s32.totalorder %v261, 0
      %vm384 = vcmp.lt.s32.totalorder %v268, 0
      %vm385 = vcmp.lt.s32.totalorder %v275, 0
      %vm386 = vcmp.lt.s32.totalorder %v282, 0
      %vm387 = vcmp.lt.s32.totalorder %v289, 0
      %vm388 = vcmp.lt.s32.totalorder %v296, 0
      %vm389 = vcmp.lt.s32.totalorder %v303, 0
      %vm390 = vcmp.lt.s32.totalorder %v310, 0
      %vm391 = vcmp.lt.s32.totalorder %v317, 0
      %vm392 = vcmp.lt.s32.totalorder %v324, 0
      %vm393 = vcmp.lt.s32.totalorder %v331, 0
      %vm394 = vcmp.lt.s32.totalorder %v338, 0
      %vm395 = vcmp.lt.s32.totalorder %v345, 0
      %vm396 = vcmp.lt.s32.totalorder %v352, 0
      %vm397 = vcmp.lt.s32.totalorder %v359, 0
      %vm398 = vcmp.lt.s32.totalorder %v366, 0
      %vm399 = vmand %vm383, %vm367
      %vm400 = vmand %vm384, %vm368
      %vm401 = vmand %vm385, %vm369
      %vm402 = vmand %vm386, %vm370
      %vm403 = vmand %vm387, %vm371
      %vm404 = vmand %vm388, %vm372
      %vm405 = vmand %vm389, %vm373
      %vm406 = vmand %vm390, %vm374
      %vm407 = vmand %vm391, %vm375
      %vm408 = vmand %vm392, %vm376
      %vm409 = vmand %vm393, %vm377
      %vm410 = vmand %vm394, %vm378
      %vm411 = vmand %vm395, %vm379
      %vm412 = vmand %vm396, %vm380
      %vm413 = vmand %vm397, %vm381
      %vm414 = vmand %vm398, %vm382
      %v415 = vadd.s32 %v261, 16
      %v416 = vadd.s32 %v268, 16
      %v417 = vadd.s32 %v275, 16
      %v418 = vadd.s32 %v282, 16
      %v419 = vadd.s32 %v289, 16
      %v420 = vadd.s32 %v296, 16
      %v421 = vadd.s32 %v303, 16
      %v422 = vadd.s32 %v310, 16
      %v423 = vadd.s32 %v317, 16
      %v424 = vadd.s32 %v324, 16
      %v425 = vadd.s32 %v331, 16
      %v426 = vadd.s32 %v338, 16
      %v427 = vadd.s32 %v345, 16
      %v428 = vadd.s32 %v352, 16
      %v429 = vadd.s32 %v359, 16
      %v430 = vadd.s32 %v366, 16
      %v431 = vsel %vm399, %v415, %v261
      %v432 = vsel %vm400, %v416, %v268
      %v433 = vsel %vm401, %v417, %v275
      %v434 = vsel %vm402, %v418, %v282
      %v435 = vsel %vm403, %v419, %v289
      %v436 = vsel %vm404, %v420, %v296
      %v437 = vsel %vm405, %v421, %v303
      %v438 = vsel %vm406, %v422, %v310
      %v439 = vsel %vm407, %v423, %v317
      %v440 = vsel %vm408, %v424, %v324
      %v441 = vsel %vm409, %v425, %v331
      %v442 = vsel %vm410, %v426, %v338
      %v443 = vsel %vm411, %v427, %v345
      %v444 = vsel %vm412, %v428, %v352
      %v445 = vsel %vm413, %v429, %v359
      %v446 = vsel %vm414, %v430, %v366
      %vm447 = vcmp.eq.s32.totalorder %v431, 0
      %vm448 = vcmp.eq.s32.totalorder %v432, 0
      %vm449 = vcmp.eq.s32.totalorder %v433, 0
      %vm450 = vcmp.eq.s32.totalorder %v434, 0
      %vm451 = vcmp.eq.s32.totalorder %v435, 0
      %vm452 = vcmp.eq.s32.totalorder %v436, 0
      %vm453 = vcmp.eq.s32.totalorder %v437, 0
      %vm454 = vcmp.eq.s32.totalorder %v438, 0
      %vm455 = vcmp.eq.s32.totalorder %v439, 0
      %vm456 = vcmp.eq.s32.totalorder %v440, 0
      %vm457 = vcmp.eq.s32.totalorder %v441, 0
      %vm458 = vcmp.eq.s32.totalorder %v442, 0
      %vm459 = vcmp.eq.s32.totalorder %v443, 0
      %vm460 = vcmp.eq.s32.totalorder %v444, 0
      %vm461 = vcmp.eq.s32.totalorder %v445, 0
      %vm462 = vcmp.eq.s32.totalorder %v446, 0
      %vm463 = vcmp.eq.s32.totalorder %v431, 15
      %vm464 = vcmp.eq.s32.totalorder %v432, 15
      %vm465 = vcmp.eq.s32.totalorder %v433, 15
      %vm466 = vcmp.eq.s32.totalorder %v434, 15
      %vm467 = vcmp.eq.s32.totalorder %v435, 15
      %vm468 = vcmp.eq.s32.totalorder %v436, 15
      %vm469 = vcmp.eq.s32.totalorder %v437, 15
      %vm470 = vcmp.eq.s32.totalorder %v438, 15
      %vm471 = vcmp.eq.s32.totalorder %v439, 15
      %vm472 = vcmp.eq.s32.totalorder %v440, 15
      %vm473 = vcmp.eq.s32.totalorder %v441, 15
      %vm474 = vcmp.eq.s32.totalorder %v442, 15
      %vm475 = vcmp.eq.s32.totalorder %v443, 15
      %vm476 = vcmp.eq.s32.totalorder %v444, 15
      %vm477 = vcmp.eq.s32.totalorder %v445, 15
      %vm478 = vcmp.eq.s32.totalorder %v446, 15
      %v479 = vrot.slane %v206, 7
      %v480 = vrot.slane %v207, 7
      %v481 = vrot.slane %v208, 7
      %v482 = vrot.slane %v209, 7
      %v483 = vrot.slane %v210, 7
      %v484 = vrot.slane %v211, 7
      %v485 = vrot.slane %v212, 7
      %v486 = vrot.slane %v213, 7
      %v487 = vrot.slane %v214, 7
      %v488 = vrot.slane %v215, 7
      %v489 = vrot.slane %v216, 7
      %v490 = vrot.slane %v217, 7
      %v491 = vrot.slane %v218, 7
      %v492 = vrot.slane %v219, 7
      %v493 = vrot.slane %v220, 7
      %v494 = vrot.slane %v221, 7
      %vm495 = vcmp.lt.s32.totalorder %v239, 1
      %v496 = vsel %vm495, %v493, %v494
      %v497 = vsel %vm495, %v492, %v493
      %v498 = vsel %vm495, %v491, %v492
      %v499 = vsel %vm495, %v490, %v491
      %v500 = vsel %vm495, %v489, %v490
      %v501 = vsel %vm495, %v488, %v489
      %v502 = vsel %vm495, %v487, %v488
      %v503 = vsel %vm495, %v486, %v487
      %v504 = vsel %vm495, %v485, %v486
      %v505 = vsel %vm495, %v484, %v485
      %v506 = vsel %vm495, %v483, %v484
      %v507 = vsel %vm495, %v482, %v483
      %v508 = vsel %vm495, %v481, %v482
      %v509 = vsel %vm495, %v480, %v481
      %v510 = vsel %vm495, %v479, %v480
      %v511 = vsel %vm495, %v494, %v479
      %v512 = vrot.slane %v206, 1
      %v513 = vrot.slane %v207, 1
      %v514 = vrot.slane %v208, 1
      %v515 = vrot.slane %v209, 1
      %v516 = vrot.slane %v210, 1
      %v517 = vrot.slane %v211, 1
      %v518 = vrot.slane %v212, 1
      %v519 = vrot.slane %v213, 1
      %v520 = vrot.slane %v214, 1
      %v521 = vrot.slane %v215, 1
      %v522 = vrot.slane %v216, 1
      %v523 = vrot.slane %v217, 1
      %v524 = vrot.slane %v218, 1
      %v525 = vrot.slane %v219, 1
      %v526 = vrot.slane %v220, 1
      %v527 = vrot.slane %v221, 1
      %vm528 = vcmp.lt.s32.totalorder %v239, 7
      %v529 = vsel %vm528, %v526, %v527
      %v530 = vsel %vm528, %v525, %v526
      %v531 = vsel %vm528, %v524, %v525
      %v532 = vsel %vm528, %v523, %v524
      %v533 = vsel %vm528, %v522, %v523
      %v534 = vsel %vm528, %v521, %v522
      %v535 = vsel %vm528, %v520, %v521
      %v536 = vsel %vm528, %v519, %v520
      %v537 = vsel %vm528, %v518, %v519
      %v538 = vsel %vm528, %v517, %v518
      %v539 = vsel %vm528, %v516, %v517
      %v540 = vsel %vm528, %v515, %v516
      %v541 = vsel %vm528, %v514, %v515
      %v542 = vsel %vm528, %v513, %v514
      %v543 = vsel %vm528, %v512, %v513
      %v544 = vsel %vm528, %v527, %v512
      %v545 = vsel %vm447, %v543, %v511
      %v546 = vsel %vm448, %v542, %v510
      %v547 = vsel %vm449, %v541, %v509
      %v548 = vsel %vm450, %v540, %v508
      %v549 = vsel %vm451, %v539, %v507
      %v550 = vsel %vm452, %v538, %v506
      %v551 = vsel %vm453, %v537, %v505
      %v552 = vsel %vm454, %v536, %v504
      %v553 = vsel %vm455, %v535, %v503
      %v554 = vsel %vm456, %v534, %v502
      %v555 = vsel %vm457, %v533, %v501
      %v556 = vsel %vm458, %v532, %v500
      %v557 = vsel %vm459, %v531, %v499
      %v558 = vsel %vm460, %v530, %v498
      %v559 = vsel %vm461, %v529, %v497
      %v560 = vsel %vm462, %v544, %v496
      %v561 = vsel %vm463, %v511, %v543
      %v562 = vsel %vm464, %v510, %v542
      %v563 = vsel %vm465, %v509, %v541
      %v564 = vsel %vm466, %v508, %v540
      %v565 = vsel %vm467, %v507, %v539
      %v566 = vsel %vm468, %v506, %v538
      %v567 = vsel %vm469, %v505, %v537
      %v568 = vsel %vm470, %v504, %v536
      %v569 = vsel %vm471, %v503, %v535
      %v570 = vsel %vm472, %v502, %v534
      %v571 = vsel %vm473, %v501, %v533
      %v572 = vsel %vm474, %v500, %v532
      %v573 = vsel %vm475, %v499, %v531
      %v574 = vsel %vm476, %v498, %v530
      %v575 = vsel %vm477, %v497, %v529
      %v576 = vsel %vm478, %v496, %v544
      %v577 = vld [vmem:[%s1] sm:$0xff]
      %v578 = vld [vmem:[%s1 + $0x8] sm:$0xff]
      %v579 = vld [vmem:[%s1 + $0x10] sm:$0xff]
      %v580 = vld [vmem:[%s1 + $0x18] sm:$0xff]
      %v581 = vld [vmem:[%s1 + $0x20] sm:$0xff]
      %v582 = vld [vmem:[%s1 + $0x28] sm:$0xff]
      %v583 = vld [vmem:[%s1 + $0x30] sm:$0xff]
      %v584 = vld [vmem:[%s1 + $0x38] sm:$0xff]
      %v585 = vld [vmem:[%s1 + $0x40] sm:$0xff]
      %v586 = vld [vmem:[%s1 + $0x48] sm:$0xff]
      %v587 = vld [vmem:[%s1 + $0x50] sm:$0xff]
      %v588 = vld [vmem:[%s1 + $0x58] sm:$0xff]
      %v589 = vld [vmem:[%s1 + $0x60] sm:$0xff]
      %v590 = vld [vmem:[%s1 + $0x68] sm:$0xff]
      %v591 = vld [vmem:[%s1 + $0x70] sm:$0xff]
      %v592 = vld [vmem:[%s1 + $0x78] sm:$0xff]
      %v593 = vld [vmem:[%s1 + $0x80] sm:$0xff]
      %v594 = vld [vmem:[%s1 + $0x88] sm:$0xff]
      %v595 = vld [vmem:[%s1 + $0x90] sm:$0xff]
      %v596 = vld [vmem:[%s1 + $0x98] sm:$0xff]
      %v597 = vld [vmem:[%s1 + $0xa0] sm:$0xff]
      %v598 = vld [vmem:[%s1 + $0xa8] sm:$0xff]
      %v599 = vld [vmem:[%s1 + $0xb0] sm:$0xff]
      %v600 = vld [vmem:[%s1 + $0xb8] sm:$0xff]
      %v601 = vld [vmem:[%s1 + $0xc0] sm:$0xff]
      %v602 = vld [vmem:[%s1 + $0xc8] sm:$0xff]
      %v603 = vld [vmem:[%s1 + $0xd0] sm:$0xff]
      %v604 = vld [vmem:[%s1 + $0xd8] sm:$0xff]
      %v605 = vld [vmem:[%s1 + $0xe0] sm:$0xff]
      %v606 = vld [vmem:[%s1 + $0xe8] sm:$0xff]
      %v607 = vld [vmem:[%s1 + $0xf0] sm:$0xff]
      %v608 = vld [vmem:[%s1 + $0xf8] sm:$0xff]
      %v609 = vld [vmem:[%s1 + $0x100] sm:$0xff]
      %v610 = vld [vmem:[%s1 + $0x108] sm:$0xff]
      %v611 = vld [vmem:[%s1 + $0x110] sm:$0xff]
      %v612 = vld [vmem:[%s1 + $0x118] sm:$0xff]
      %v613 = vld [vmem:[%s1 + $0x120] sm:$0xff]
      %v614 = vld [vmem:[%s1 + $0x128] sm:$0xff]
      %v615 = vld [vmem:[%s1 + $0x130] sm:$0xff]
      %v616 = vld [vmem:[%s1 + $0x138] sm:$0xff]
      %v617 = vld [vmem:[%s1 + $0x140] sm:$0xff]
      %v618 = vld [vmem:[%s1 + $0x148] sm:$0xff]
      %v619 = vld [vmem:[%s1 + $0x150] sm:$0xff]
      %v620 = vld [vmem:[%s1 + $0x158] sm:$0xff]
      %v621 = vld [vmem:[%s1 + $0x160] sm:$0xff]
      %v622 = vld [vmem:[%s1 + $0x168] sm:$0xff]
      %v623 = vld [vmem:[%s1 + $0x170] sm:$0xff]
      %v624 = vld [vmem:[%s1 + $0x178] sm:$0xff]
      %625 = vmatprep.subr.mxu0 0.0
      %626 = vmatpush1.msra.mxu0 %v592
      %627 = vmatprep.subr.mxu0 0.0
      %628 = vmatpush1.msra.mxu0 %v591
      %629 = vmatprep.subr.mxu0 0.0
      %630 = vmatpush1.msra.mxu0 %v590
      %631 = vmatprep.subr.mxu0 0.0
      %632 = vmatpush1.msra.mxu0 %v589
      %633 = vmatprep.subr.mxu0 0.0
      %634 = vmatpush1.msra.mxu0 %v588
      %635 = vmatprep.subr.mxu0 0.0
      %636 = vmatpush1.msra.mxu0 %v587
      %637 = vmatprep.subr.mxu0 0.0
      %638 = vmatpush1.msra.mxu0 %v586
      %639 = vmatprep.subr.mxu0 0.0
      %640 = vmatpush1.msra.mxu0 %v585
      %641 = vmatprep.subr.mxu0 0.0
      %642 = vmatpush1.msra.mxu0 %v584
      %643 = vmatprep.subr.mxu0 0.0
      %644 = vmatpush1.msra.mxu0 %v583
      %645 = vmatprep.subr.mxu0 0.0
      %646 = vmatpush1.msra.mxu0 %v582
      %647 = vmatprep.subr.mxu0 0.0
      %648 = vmatpush1.msra.mxu0 %v581
      %649 = vmatprep.subr.mxu0 0.0
      %650 = vmatpush1.msra.mxu0 %v580
      %651 = vmatprep.subr.mxu0 0.0
      %652 = vmatpush1.msra.mxu0 %v579
      %653 = vmatprep.subr.mxu0 0.0
      %654 = vmatpush1.msra.mxu0 %v578
      %655 = vmatprep.subr.mxu0 0.0
      %656 = vmatpush1.msra.mxu0 %v577
      %657 = vmatprep.subr.mxu0 0.0
      %658 = vmatpush2.msra.mxu0 %v608
      %659 = vmatprep.subr.mxu0 0.0
      %660 = vmatpush2.msra.mxu0 %v607
      %661 = vmatprep.subr.mxu0 0.0
      %662 = vmatpush2.msra.mxu0 %v606
      %663 = vmatprep.subr.mxu0 0.0
      %664 = vmatpush2.msra.mxu0 %v605
      %665 = vmatprep.subr.mxu0 0.0
      %666 = vmatpush2.msra.mxu0 %v604
      %667 = vmatprep.subr.mxu0 0.0
      %668 = vmatpush2.msra.mxu0 %v603
      %669 = vmatprep.subr.mxu0 0.0
      %670 = vmatpush2.msra.mxu0 %v602
      %671 = vmatprep.subr.mxu0 0.0
      %672 = vmatpush2.msra.mxu0 %v601
      %673 = vmatprep.subr.mxu0 0.0
      %674 = vmatpush2.msra.mxu0 %v600
      %675 = vmatprep.subr.mxu0 0.0
      %676 = vmatpush2.msra.mxu0 %v599
      %677 = vmatprep.subr.mxu0 0.0
      %678 = vmatpush2.msra.mxu0 %v598
      %679 = vmatprep.subr.mxu0 0.0
      %680 = vmatpush2.msra.mxu0 %v597
      %681 = vmatprep.subr.mxu0 0.0
      %682 = vmatpush2.msra.mxu0 %v596
      %683 = vmatprep.subr.mxu0 0.0
      %684 = vmatpush2.msra.mxu0 %v595
      %685 = vmatprep.subr.mxu0 0.0
      %686 = vmatpush2.msra.mxu0 %v594
      %687 = vmatprep.subr.mxu0 0.0
      %688 = vmatpush2.msra.mxu0 %v593
      %689 = vmatprep.mubr.f32.mxu0 %v206
      %690 = vmatmul.mubr.f32.gmra.mxu0 %v545
      %v691 = vpop.f32.mrf.mxu0
      %v692 = vadd.f32 0.0, %v691
      %v693 = vpop.f32.mrf.mxu0
      %694 = vmatprep.mubr.f32.mxu0 %v207
      %695 = vmatmul.mubr.f32.gmra.mxu0 %v546
      %v696 = vpop.f32.mrf.mxu0
      %v697 = vadd.f32 0.0, %v696
      %v698 = vpop.f32.mrf.mxu0
      %699 = vmatprep.mubr.f32.mxu0 %v208
      %700 = vmatmul.mubr.f32.gmra.mxu0 %v547
      %v701 = vpop.f32.mrf.mxu0
      %v702 = vadd.f32 0.0, %v701
      %v703 = vpop.f32.mrf.mxu0
      %704 = vmatprep.mubr.f32.mxu0 %v209
      %705 = vmatmul.mubr.f32.gmra.mxu0 %v548
      %v706 = vpop.f32.mrf.mxu0
      %v707 = vadd.f32 0.0, %v706
      %v708 = vpop.f32.mrf.mxu0
      %709 = vmatprep.mubr.f32.mxu0 %v210
      %710 = vmatmul.mubr.f32.gmra.mxu0 %v549
      %v711 = vpop.f32.mrf.mxu0
      %v712 = vadd.f32 0.0, %v711
      %v713 = vpop.f32.mrf.mxu0
      %714 = vmatprep.mubr.f32.mxu0 %v211
      %715 = vmatmul.mubr.f32.gmra.mxu0 %v550
      %v716 = vpop.f32.mrf.mxu0
      %v717 = vadd.f32 0.0, %v716
      %v718 = vpop.f32.mrf.mxu0
      %719 = vmatprep.mubr.f32.mxu0 %v212
      %720 = vmatmul.mubr.f32.gmra.mxu0 %v551
      %v721 = vpop.f32.mrf.mxu0
      %v722 = vadd.f32 0.0, %v721
      %v723 = vpop.f32.mrf.mxu0
      %724 = vmatprep.mubr.f32.mxu0 %v213
      %725 = vmatmul.mubr.f32.gmra.mxu0 %v552
      %v726 = vpop.f32.mrf.mxu0
      %v727 = vadd.f32 0.0, %v726
      %v728 = vpop.f32.mrf.mxu0
      %729 = vmatprep.mubr.f32.mxu0 %v214
      %730 = vmatmul.mubr.f32.gmra.mxu0 %v553
      %v731 = vpop.f32.mrf.mxu0
      %v732 = vadd.f32 0.0, %v731
      %v733 = vpop.f32.mrf.mxu0
      %734 = vmatprep.mubr.f32.mxu0 %v215
      %735 = vmatmul.mubr.f32.gmra.mxu0 %v554
      %v736 = vpop.f32.mrf.mxu0
      %v737 = vadd.f32 0.0, %v736
      %v738 = vpop.f32.mrf.mxu0
      %739 = vmatprep.mubr.f32.mxu0 %v216
      %740 = vmatmul.mubr.f32.gmra.mxu0 %v555
      %v741 = vpop.f32.mrf.mxu0
      %v742 = vadd.f32 0.0, %v741
      %v743 = vpop.f32.mrf.mxu0
      %744 = vmatprep.mubr.f32.mxu0 %v217
      %745 = vmatmul.mubr.f32.gmra.mxu0 %v556
      %v746 = vpop.f32.mrf.mxu0
      %v747 = vadd.f32 0.0, %v746
      %v748 = vpop.f32.mrf.mxu0
      %749 = vmatprep.mubr.f32.mxu0 %v218
      %750 = vmatmul.mubr.f32.gmra.mxu0 %v557
      %v751 = vpop.f32.mrf.mxu0
      %v752 = vadd.f32 0.0, %v751
      %v753 = vpop.f32.mrf.mxu0
      %754 = vmatprep.mubr.f32.mxu0 %v219
      %755 = vmatmul.mubr.f32.gmra.mxu0 %v558
      %v756 = vpop.f32.mrf.mxu0
      %v757 = vadd.f32 0.0, %v756
      %v758 = vpop.f32.mrf.mxu0
      %759 = vmatprep.mubr.f32.mxu0 %v220
      %760 = vmatmul.mubr.f32.gmra.mxu0 %v559
      %v761 = vpop.f32.mrf.mxu0
      %v762 = vadd.f32 0.0, %v761
      %v763 = vpop.f32.mrf.mxu0
      %764 = vmatprep.mubr.f32.mxu0 %v221
      %765 = vmatmul.mubr.f32.gmra.mxu0 %v560
      %v766 = vpop.f32.mrf.mxu0
      %v767 = vadd.f32 0.0, %v766
      %v768 = vpop.f32.mrf.mxu0
      %769 = vdwg.mxu0
      %770 = vmatprep.subr.mxu0 0.0
      %771 = vmatpush1.msra.mxu0 %v624
      %772 = vmatprep.subr.mxu0 0.0
      %773 = vmatpush1.msra.mxu0 %v623
      %774 = vmatprep.subr.mxu0 0.0
      %775 = vmatpush1.msra.mxu0 %v622
      %776 = vmatprep.subr.mxu0 0.0
      %777 = vmatpush1.msra.mxu0 %v621
      %778 = vmatprep.subr.mxu0 0.0
      %779 = vmatpush1.msra.mxu0 %v620
      %780 = vmatprep.subr.mxu0 0.0
      %781 = vmatpush1.msra.mxu0 %v619
      %782 = vmatprep.subr.mxu0 0.0
      %783 = vmatpush1.msra.mxu0 %v618
      %784 = vmatprep.subr.mxu0 0.0
      %785 = vmatpush1.msra.mxu0 %v617
      %786 = vmatprep.subr.mxu0 0.0
      %787 = vmatpush1.msra.mxu0 %v616
      %788 = vmatprep.subr.mxu0 0.0
      %789 = vmatpush1.msra.mxu0 %v615
      %790 = vmatprep.subr.mxu0 0.0
      %791 = vmatpush1.msra.mxu0 %v614
      %792 = vmatprep.subr.mxu0 0.0
      %793 = vmatpush1.msra.mxu0 %v613
      %794 = vmatprep.subr.mxu0 0.0
      %795 = vmatpush1.msra.mxu0 %v612
      %796 = vmatprep.subr.mxu0 0.0
      %797 = vmatpush1.msra.mxu0 %v611
      %798 = vmatprep.subr.mxu0 0.0
      %799 = vmatpush1.msra.mxu0 %v610
      %800 = vmatprep.subr.mxu0 0.0
      %801 = vmatpush1.msra.mxu0 %v609
      %802 = vmatprep.subr.mxu0 0.0
      %803 = vmatpush2.msra.mxu0 0.0
      %804 = vmatprep.subr.mxu0 0.0
      %805 = vmatpush2.msra.mxu0 0.0
      %806 = vmatprep.subr.mxu0 0.0
      %807 = vmatpush2.msra.mxu0 0.0
      %808 = vmatprep.subr.mxu0 0.0
      %809 = vmatpush2.msra.mxu0 0.0
      %810 = vmatprep.subr.mxu0 0.0
      %811 = vmatpush2.msra.mxu0 0.0
      %812 = vmatprep.subr.mxu0 0.0
      %813 = vmatpush2.msra.mxu0 0.0
      %814 = vmatprep.subr.mxu0 0.0
      %815 = vmatpush2.msra.mxu0 0.0
      %816 = vmatprep.subr.mxu0 0.0
      %817 = vmatpush2.msra.mxu0 0.0
      %818 = vmatprep.subr.mxu0 0.0
      %819 = vmatpush2.msra.mxu0 0.0
      %820 = vmatprep.subr.mxu0 0.0
      %821 = vmatpush2.msra.mxu0 0.0
      %822 = vmatprep.subr.mxu0 0.0
      %823 = vmatpush2.msra.mxu0 0.0
      %824 = vmatprep.subr.mxu0 0.0
      %825 = vmatpush2.msra.mxu0 0.0
      %826 = vmatprep.subr.mxu0 0.0
      %827 = vmatpush2.msra.mxu0 0.0
      %828 = vmatprep.subr.mxu0 0.0
      %829 = vmatpush2.msra.mxu0 0.0
      %830 = vmatprep.subr.mxu0 0.0
      %831 = vmatpush2.msra.mxu0 0.0
      %832 = vmatprep.subr.mxu0 0.0
      %833 = vmatpush2.msra.mxu0 0.0
      %834 = vmatprep.mubr.f32.mxu0 0.0
      %835 = vmatmul.mubr.f32.gmra.mxu0 %v561
      %v836 = vpop.f32.mrf.mxu0
      %v837 = vadd.f32 %v692, %v836
      %v838 = vpop.f32.mrf.mxu0
      %839 = vmatprep.mubr.f32.mxu0 0.0
      %840 = vmatmul.mubr.f32.gmra.mxu0 %v562
      %v841 = vpop.f32.mrf.mxu0
      %v842 = vadd.f32 %v697, %v841
      %v843 = vpop.f32.mrf.mxu0
      %844 = vmatprep.mubr.f32.mxu0 0.0
      %845 = vmatmul.mubr.f32.gmra.mxu0 %v563
      %v846 = vpop.f32.mrf.mxu0
      %v847 = vadd.f32 %v702, %v846
      %v848 = vpop.f32.mrf.mxu0
      %849 = vmatprep.mubr.f32.mxu0 0.0
      %850 = vmatmul.mubr.f32.gmra.mxu0 %v564
      %v851 = vpop.f32.mrf.mxu0
      %v852 = vadd.f32 %v707, %v851
      %v853 = vpop.f32.mrf.mxu0
      %854 = vmatprep.mubr.f32.mxu0 0.0
      %855 = vmatmul.mubr.f32.gmra.mxu0 %v565
      %v856 = vpop.f32.mrf.mxu0
      %v857 = vadd.f32 %v712, %v856
      %v858 = vpop.f32.mrf.mxu0
      %859 = vmatprep.mubr.f32.mxu0 0.0
      %860 = vmatmul.mubr.f32.gmra.mxu0 %v566
      %v861 = vpop.f32.mrf.mxu0
      %v862 = vadd.f32 %v717, %v861
      %v863 = vpop.f32.mrf.mxu0
      %864 = vmatprep.mubr.f32.mxu0 0.0
      %865 = vmatmul.mubr.f32.gmra.mxu0 %v567
      %v866 = vpop.f32.mrf.mxu0
      %v867 = vadd.f32 %v722, %v866
      %v868 = vpop.f32.mrf.mxu0
      %869 = vmatprep.mubr.f32.mxu0 0.0
      %870 = vmatmul.mubr.f32.gmra.mxu0 %v568
      %v871 = vpop.f32.mrf.mxu0
      %v872 = vadd.f32 %v727, %v871
      %v873 = vpop.f32.mrf.mxu0
      %874 = vmatprep.mubr.f32.mxu0 0.0
      %875 = vmatmul.mubr.f32.gmra.mxu0 %v569
      %v876 = vpop.f32.mrf.mxu0
      %v877 = vadd.f32 %v732, %v876
      %v878 = vpop.f32.mrf.mxu0
      %879 = vmatprep.mubr.f32.mxu0 0.0
      %880 = vmatmul.mubr.f32.gmra.mxu0 %v570
      %v881 = vpop.f32.mrf.mxu0
      %v882 = vadd.f32 %v737, %v881
      %v883 = vpop.f32.mrf.mxu0
      %884 = vmatprep.mubr.f32.mxu0 0.0
      %885 = vmatmul.mubr.f32.gmra.mxu0 %v571
      %v886 = vpop.f32.mrf.mxu0
      %v887 = vadd.f32 %v742, %v886
      %v888 = vpop.f32.mrf.mxu0
      %889 = vmatprep.mubr.f32.mxu0 0.0
      %890 = vmatmul.mubr.f32.gmra.mxu0 %v572
      %v891 = vpop.f32.mrf.mxu0
      %v892 = vadd.f32 %v747, %v891
      %v893 = vpop.f32.mrf.mxu0
      %894 = vmatprep.mubr.f32.mxu0 0.0
      %895 = vmatmul.mubr.f32.gmra.mxu0 %v573
      %v896 = vpop.f32.mrf.mxu0
      %v897 = vadd.f32 %v752, %v896
      %v898 = vpop.f32.mrf.mxu0
      %899 = vmatprep.mubr.f32.mxu0 0.0
      %900 = vmatmul.mubr.f32.gmra.mxu0 %v574
      %v901 = vpop.f32.mrf.mxu0
      %v902 = vadd.f32 %v757, %v901
      %v903 = vpop.f32.mrf.mxu0
      %904 = vmatprep.mubr.f32.mxu0 0.0
      %905 = vmatmul.mubr.f32.gmra.mxu0 %v575
      %v906 = vpop.f32.mrf.mxu0
      %v907 = vadd.f32 %v762, %v906
      %v908 = vpop.f32.mrf.mxu0
      %909 = vmatprep.mubr.f32.mxu0 0.0
      %910 = vmatmul.mubr.f32.gmra.mxu0 %v576
      %v911 = vpop.f32.mrf.mxu0
      %v912 = vadd.f32 %v767, %v911
      %v913 = vpop.f32.mrf.mxu0
      %914 = vdwg.mxu0
      %v915 = vadd.f32 %v837, %v842
      %v916 = vrot.slane %v915, 4
      %v917 = vadd.f32 %v915, %v916
      %v918 = vrot.slane %v917, 2
      %v919 = vadd.f32 %v917, %v918
      %v920 = vrot.slane %v919, 1
      %v921 = vadd.f32 %v919, %v920
      %v922 = vadd.f32 %v847, %v852
      %v923 = vrot.slane %v922, 4
      %v924 = vadd.f32 %v922, %v923
      %v925 = vrot.slane %v924, 2
      %v926 = vadd.f32 %v924, %v925
      %v927 = vrot.slane %v926, 1
      %v928 = vadd.f32 %v926, %v927
      %v929 = vadd.f32 %v857, %v862
      %v930 = vrot.slane %v929, 4
      %v931 = vadd.f32 %v929, %v930
      %v932 = vrot.slane %v931, 2
      %v933 = vadd.f32 %v931, %v932
      %v934 = vrot.slane %v933, 1
      %v935 = vadd.f32 %v933, %v934
      %v936 = vadd.f32 %v867, %v872
      %v937 = vrot.slane %v936, 4
      %v938 = vadd.f32 %v936, %v937
      %v939 = vrot.slane %v938, 2
      %v940 = vadd.f32 %v938, %v939
      %v941 = vrot.slane %v940, 1
      %v942 = vadd.f32 %v940, %v941
      %v943 = vadd.f32 %v877, %v882
      %v944 = vrot.slane %v943, 4
      %v945 = vadd.f32 %v943, %v944
      %v946 = vrot.slane %v945, 2
      %v947 = vadd.f32 %v945, %v946
      %v948 = vrot.slane %v947, 1
      %v949 = vadd.f32 %v947, %v948
      %v950 = vadd.f32 %v887, %v892
      %v951 = vrot.slane %v950, 4
      %v952 = vadd.f32 %v950, %v951
      %v953 = vrot.slane %v952, 2
      %v954 = vadd.f32 %v952, %v953
      %v955 = vrot.slane %v954, 1
      %v956 = vadd.f32 %v954, %v955
      %v957 = vadd.f32 %v897, %v902
      %v958 = vrot.slane %v957, 4
      %v959 = vadd.f32 %v957, %v958
      %v960 = vrot.slane %v959, 2
      %v961 = vadd.f32 %v959, %v960
      %v962 = vrot.slane %v961, 1
      %v963 = vadd.f32 %v961, %v962
      %v964 = vadd.f32 %v907, %v912
      %v965 = vrot.slane %v964, 4
      %v966 = vadd.f32 %v964, %v965
      %v967 = vrot.slane %v966, 2
      %v968 = vadd.f32 %v966, %v967
      %v969 = vrot.slane %v968, 1
      %v970 = vadd.f32 %v968, %v969
      %v971 = vmul.f32 %v837, %v837
      %v972 = vmul.f32 %v842, %v842
      %v973 = vmul.f32 %v847, %v847
      %v974 = vmul.f32 %v852, %v852
      %v975 = vmul.f32 %v857, %v857
      %v976 = vmul.f32 %v862, %v862
      %v977 = vmul.f32 %v867, %v867
      %v978 = vmul.f32 %v872, %v872
      %v979 = vmul.f32 %v877, %v877
      %v980 = vmul.f32 %v882, %v882
      %v981 = vmul.f32 %v887, %v887
      %v982 = vmul.f32 %v892, %v892
      %v983 = vmul.f32 %v897, %v897
      %v984 = vmul.f32 %v902, %v902
      %v985 = vmul.f32 %v907, %v907
      %v986 = vmul.f32 %v912, %v912
      %v987 = vadd.f32 %v971, %v972
      %v988 = vrot.slane %v987, 4
      %v989 = vadd.f32 %v987, %v988
      %v990 = vrot.slane %v989, 2
      %v991 = vadd.f32 %v989, %v990
      %v992 = vrot.slane %v991, 1
      %v993 = vadd.f32 %v991, %v992
      %v994 = vadd.f32 %v973, %v974
      %v995 = vrot.slane %v994, 4
      %v996 = vadd.f32 %v994, %v995
      %v997 = vrot.slane %v996, 2
      %v998 = vadd.f32 %v996, %v997
      %v999 = vrot.slane %v998, 1
      %v1000 = vadd.f32 %v998, %v999
      %v1001 = vadd.f32 %v975, %v976
      %v1002 = vrot.slane %v1001, 4
      %v1003 = vadd.f32 %v1001, %v1002
      %v1004 = vrot.slane %v1003, 2
      %v1005 = vadd.f32 %v1003, %v1004
      %v1006 = vrot.slane %v1005, 1
      %v1007 = vadd.f32 %v1005, %v1006
      %v1008 = vadd.f32 %v977, %v978
      %v1009 = vrot.slane %v1008, 4
      %v1010 = vadd.f32 %v1008, %v1009
      %v1011 = vrot.slane %v1010, 2
      %v1012 = vadd.f32 %v1010, %v1011
      %v1013 = vrot.slane %v1012, 1
      %v1014 = vadd.f32 %v1012, %v1013
      %v1015 = vadd.f32 %v979, %v980
      %v1016 = vrot.slane %v1015, 4
      %v1017 = vadd.f32 %v1015, %v1016
      %v1018 = vrot.slane %v1017, 2
      %v1019 = vadd.f32 %v1017, %v1018
      %v1020 = vrot.slane %v1019, 1
      %v1021 = vadd.f32 %v1019, %v1020
      %v1022 = vadd.f32 %v981, %v982
      %v1023 = vrot.slane %v1022, 4
      %v1024 = vadd.f32 %v1022, %v1023
      %v1025 = vrot.slane %v1024, 2
      %v1026 = vadd.f32 %v1024, %v1025
      %v1027 = vrot.slane %v1026, 1
      %v1028 = vadd.f32 %v1026, %v1027
      %v1029 = vadd.f32 %v983, %v984
      %v1030 = vrot.slane %v1029, 4
      %v1031 = vadd.f32 %v1029, %v1030
      %v1032 = vrot.slane %v1031, 2
      %v1033 = vadd.f32 %v1031, %v1032
      %v1034 = vrot.slane %v1033, 1
      %v1035 = vadd.f32 %v1033, %v1034
      %v1036 = vadd.f32 %v985, %v986
      %v1037 = vrot.slane %v1036, 4
      %v1038 = vadd.f32 %v1036, %v1037
      %v1039 = vrot.slane %v1038, 2
      %v1040 = vadd.f32 %v1038, %v1039
      %v1041 = vrot.slane %v1040, 1
      %v1042 = vadd.f32 %v1040, %v1041
      %vm1051 = vcmask 1041409
      %v1052 = vsel %vm1051, %v928, %v921
      %vm1053 = vcmask 1042434
      %v1054 = vsel %vm1053, %v935, %v1052
      %vm1055 = vcmask 1043459
      %v1056 = vsel %vm1055, %v942, %v1054
      %vm1057 = vcmask 1044484
      %v1058 = vsel %vm1057, %v949, %v1056
      %vm1059 = vcmask 1045509
      %v1060 = vsel %vm1059, %v956, %v1058
      %vm1061 = vcmask 1046534
      %v1062 = vsel %vm1061, %v963, %v1060
      %vm1063 = vcmask 1047559
      %v1064 = vsel %vm1063, %v970, %v1062
      %v1074 = vsel %vm1051, %v1000, %v993
      %v1075 = vsel %vm1053, %v1007, %v1074
      %v1076 = vsel %vm1055, %v1014, %v1075
      %v1077 = vsel %vm1057, %v1021, %v1076
      %v1078 = vsel %vm1059, %v1028, %v1077
      %v1079 = vsel %vm1061, %v1035, %v1078
      %v1080 = vsel %vm1063, %v1042, %v1079
      %1082 = vmatprep.subr.mxu0 0.0
      %1083 = vmatpush1.msra.mxu0 %v237
      %1084 = vmatprep.subr.mxu0 0.0
      %1085 = vmatpush1.msra.mxu0 %v236
      %1086 = vmatprep.subr.mxu0 0.0
      %1087 = vmatpush1.msra.mxu0 %v235
      %1088 = vmatprep.subr.mxu0 0.0
      %1089 = vmatpush1.msra.mxu0 %v234
      %1090 = vmatprep.subr.mxu0 0.0
      %1091 = vmatpush1.msra.mxu0 %v233
      %1092 = vmatprep.subr.mxu0 0.0
      %1093 = vmatpush1.msra.mxu0 %v232
      %1094 = vmatprep.subr.mxu0 0.0
      %1095 = vmatpush1.msra.mxu0 %v231
      %1096 = vmatprep.subr.mxu0 0.0
      %1097 = vmatpush1.msra.mxu0 %v230
      %1098 = vmatprep.subr.mxu0 0.0
      %1099 = vmatpush1.msra.mxu0 %v229
      %1100 = vmatprep.subr.mxu0 0.0
      %1101 = vmatpush1.msra.mxu0 %v228
      %1102 = vmatprep.subr.mxu0 0.0
      %1103 = vmatpush1.msra.mxu0 %v227
      %1104 = vmatprep.subr.mxu0 0.0
      %1105 = vmatpush1.msra.mxu0 %v226
      %1106 = vmatprep.subr.mxu0 0.0
      %1107 = vmatpush1.msra.mxu0 %v225
      %1108 = vmatprep.subr.mxu0 0.0
      %1109 = vmatpush1.msra.mxu0 %v224
      %1110 = vmatprep.subr.mxu0 0.0
      %1111 = vmatpush1.msra.mxu0 %v223
      %1112 = vmatprep.subr.mxu0 0.0
      %1113 = vmatpush1.msra.mxu0 %v222
      %1114 = vmatprep.subr.mxu0 0.0
      %1115 = vmatpush2.msra.mxu0 0.0
      %1116 = vmatprep.subr.mxu0 0.0
      %1117 = vmatpush2.msra.mxu0 0.0
      %1118 = vmatprep.subr.mxu0 0.0
      %1119 = vmatpush2.msra.mxu0 0.0
      %1120 = vmatprep.subr.mxu0 0.0
      %1121 = vmatpush2.msra.mxu0 0.0
      %1122 = vmatprep.subr.mxu0 0.0
      %1123 = vmatpush2.msra.mxu0 0.0
      %1124 = vmatprep.subr.mxu0 0.0
      %1125 = vmatpush2.msra.mxu0 0.0
      %1126 = vmatprep.subr.mxu0 0.0
      %1127 = vmatpush2.msra.mxu0 0.0
      %1128 = vmatprep.subr.mxu0 0.0
      %1129 = vmatpush2.msra.mxu0 0.0
      %1130 = vmatprep.subr.mxu0 0.0
      %1131 = vmatpush2.msra.mxu0 0.0
      %1132 = vmatprep.subr.mxu0 0.0
      %1133 = vmatpush2.msra.mxu0 0.0
      %1134 = vmatprep.subr.mxu0 0.0
      %1135 = vmatpush2.msra.mxu0 0.0
      %1136 = vmatprep.subr.mxu0 0.0
      %1137 = vmatpush2.msra.mxu0 0.0
      %1138 = vmatprep.subr.mxu0 0.0
      %1139 = vmatpush2.msra.mxu0 0.0
      %1140 = vmatprep.subr.mxu0 0.0
      %1141 = vmatpush2.msra.mxu0 0.0
      %1142 = vmatprep.subr.mxu0 0.0
      %1143 = vmatpush2.msra.mxu0 0.0
      %1144 = vmatprep.subr.mxu0 0.0
      %1145 = vmatpush2.msra.mxu0 0.0
      %1146 = vmatprep.mubr.f32.mxu0 0.0
      %1147 = vmatmul.mubr.f32.gmra.mxu0 %v1064
      %v1148 = vpop.f32.mrf.mxu0
      %v1149 = vadd.f32 0.0, %v1148
      %v1150 = vpop.f32.mrf.mxu0
      %1151 = vmatprep.mubr.f32.mxu0 0.0
      %1152 = vmatmul.mubr.f32.gmra.mxu0 %v1080
      %v1153 = vpop.f32.mrf.mxu0
      %v1154 = vadd.f32 0.0, %v1153
      %v1155 = vpop.f32.mrf.mxu0
      %1156 = vdwg.mxu0
      %v1157 = vmul.f32 %v1149, %v1149
      %v1158 = vsub.f32 %v1154, %v1157
      %v1159 = vmax.f32 %v1158, 0.0
      %v1160 = vadd.f32 %v1159, 1e-05
      %v1161 = vrsqrt.pop %v1160
      %v1163 = vcombine.high %v1149, %v1149
      %v1165 = vunpack.c.l.s4 1966171168
      %v1166 = vunpack.c.0.s8 %v1165
      %v1167 = vlaneseq
      %v1168 = vshrl.u32 %v1167, 7
      %v1169 = vsub.s32 %v1166, %v1168
      %v1170 = vrot.slane %v1149, %v1169
      %v1172 = vunpack.c.l.s4 1966171168
      %v1173 = vunpack.c.0.s8 %v1172
      %v1174 = vlaneseq
      %v1175 = vshrl.u32 %v1174, 7
      %v1176 = vsub.s32 %v1173, %v1175
      %v1177 = vrot.slane %v1163, %v1176
      %v1178 = vcombine.high %v1170, %v1170
      %v1179 = vcombine.high %v1177, %v1177
      %v1181 = vunpack.c.l.s4 1966171168
      %v1182 = vunpack.c.0.s8 %v1181
      %v1183 = vlaneseq
      %v1184 = vshrl.u32 %v1183, 7
      %v1185 = vsub.s32 %v1182, %v1184
      %v1186 = vrot.slane %v1170, %v1185
      %v1188 = vunpack.c.l.s4 1966171168
      %v1189 = vunpack.c.0.s8 %v1188
      %v1190 = vlaneseq
      %v1191 = vshrl.u32 %v1190, 7
      %v1192 = vsub.s32 %v1189, %v1191
      %v1193 = vrot.slane %v1177, %v1192
      %v1195 = vunpack.c.l.s4 1966171168
      %v1196 = vunpack.c.0.s8 %v1195
      %v1197 = vlaneseq
      %v1198 = vshrl.u32 %v1197, 7
      %v1199 = vsub.s32 %v1196, %v1198
      %v1200 = vrot.slane %v1178, %v1199
      %v1202 = vunpack.c.l.s4 1966171168
      %v1203 = vunpack.c.0.s8 %v1202
      %v1204 = vlaneseq
      %v1205 = vshrl.u32 %v1204, 7
      %v1206 = vsub.s32 %v1203, %v1205
      %v1207 = vrot.slane %v1179, %v1206
      %v1208 = vcombine.high %v1186, %v1186
      %v1209 = vcombine.high %v1193, %v1193
      %v1210 = vcombine.high %v1200, %v1200
      %v1211 = vcombine.high %v1207, %v1207
      %v1212 = vlaneseq
      %v1213 = vshrl.u32 %v1212, 7
      %v1214 = vsub.s32 0, %v1213
      %v1215 = vrot.slane %v1186, %v1214
      %v1216 = vlaneseq
      %v1217 = vshrl.u32 %v1216, 7
      %v1218 = vsub.s32 0, %v1217
      %v1219 = vrot.slane %v1200, %v1218
      %v1220 = vlaneseq
      %v1221 = vshrl.u32 %v1220, 7
      %v1222 = vsub.s32 0, %v1221
      %v1223 = vrot.slane %v1208, %v1222
      %v1224 = vlaneseq
      %v1225 = vshrl.u32 %v1224, 7
      %v1226 = vsub.s32 0, %v1225
      %v1227 = vrot.slane %v1210, %v1226
      %v1228 = vlaneseq
      %v1229 = vshrl.u32 %v1228, 7
      %v1230 = vsub.s32 0, %v1229
      %v1231 = vrot.slane %v1193, %v1230
      %v1232 = vlaneseq
      %v1233 = vshrl.u32 %v1232, 7
      %v1234 = vsub.s32 0, %v1233
      %v1235 = vrot.slane %v1207, %v1234
      %v1236 = vlaneseq
      %v1237 = vshrl.u32 %v1236, 7
      %v1238 = vsub.s32 0, %v1237
      %v1239 = vrot.slane %v1209, %v1238
      %v1240 = vlaneseq
      %v1241 = vshrl.u32 %v1240, 7
      %v1242 = vsub.s32 0, %v1241
      %v1243 = vrot.slane %v1211, %v1242
      %v1252 = vsub.f32 %v837, %v1215
      %v1253 = vsub.f32 %v842, %v1215
      %v1254 = vsub.f32 %v847, %v1219
      %v1255 = vsub.f32 %v852, %v1219
      %v1256 = vsub.f32 %v857, %v1223
      %v1257 = vsub.f32 %v862, %v1223
      %v1258 = vsub.f32 %v867, %v1227
      %v1259 = vsub.f32 %v872, %v1227
      %v1260 = vsub.f32 %v877, %v1231
      %v1261 = vsub.f32 %v882, %v1231
      %v1262 = vsub.f32 %v887, %v1235
      %v1263 = vsub.f32 %v892, %v1235
      %v1264 = vsub.f32 %v897, %v1239
      %v1265 = vsub.f32 %v902, %v1239
      %v1266 = vsub.f32 %v907, %v1243
      %v1267 = vsub.f32 %v912, %v1243
      %v1269 = vcombine.high %v1161, %v1161
      %v1271 = vunpack.c.l.s4 1966171168
      %v1272 = vunpack.c.0.s8 %v1271
      %v1273 = vlaneseq
      %v1274 = vshrl.u32 %v1273, 7
      %v1275 = vsub.s32 %v1272, %v1274
      %v1276 = vrot.slane %v1161, %v1275
      %v1278 = vunpack.c.l.s4 1966171168
      %v1279 = vunpack.c.0.s8 %v1278
      %v1280 = vlaneseq
      %v1281 = vshrl.u32 %v1280, 7
      %v1282 = vsub.s32 %v1279, %v1281
      %v1283 = vrot.slane %v1269, %v1282
      %v1284 = vcombine.high %v1276, %v1276
      %v1285 = vcombine.high %v1283, %v1283
      %v1287 = vunpack.c.l.s4 1966171168
      %v1288 = vunpack.c.0.s8 %v1287
      %v1289 = vlaneseq
      %v1290 = vshrl.u32 %v1289, 7
      %v1291 = vsub.s32 %v1288, %v1290
      %v1292 = vrot.slane %v1276, %v1291
      %v1294 = vunpack.c.l.s4 1966171168
      %v1295 = vunpack.c.0.s8 %v1294
      %v1296 = vlaneseq
      %v1297 = vshrl.u32 %v1296, 7
      %v1298 = vsub.s32 %v1295, %v1297
      %v1299 = vrot.slane %v1283, %v1298
      %v1301 = vunpack.c.l.s4 1966171168
      %v1302 = vunpack.c.0.s8 %v1301
      %v1303 = vlaneseq
      %v1304 = vshrl.u32 %v1303, 7
      %v1305 = vsub.s32 %v1302, %v1304
      %v1306 = vrot.slane %v1284, %v1305
      %v1308 = vunpack.c.l.s4 1966171168
      %v1309 = vunpack.c.0.s8 %v1308
      %v1310 = vlaneseq
      %v1311 = vshrl.u32 %v1310, 7
      %v1312 = vsub.s32 %v1309, %v1311
      %v1313 = vrot.slane %v1285, %v1312
      %v1314 = vcombine.high %v1292, %v1292
      %v1315 = vcombine.high %v1299, %v1299
      %v1316 = vcombine.high %v1306, %v1306
      %v1317 = vcombine.high %v1313, %v1313
      %v1318 = vlaneseq
      %v1319 = vshrl.u32 %v1318, 7
      %v1320 = vsub.s32 0, %v1319
      %v1321 = vrot.slane %v1292, %v1320
      %v1322 = vlaneseq
      %v1323 = vshrl.u32 %v1322, 7
      %v1324 = vsub.s32 0, %v1323
      %v1325 = vrot.slane %v1306, %v1324
      %v1326 = vlaneseq
      %v1327 = vshrl.u32 %v1326, 7
      %v1328 = vsub.s32 0, %v1327
      %v1329 = vrot.slane %v1314, %v1328
      %v1330 = vlaneseq
      %v1331 = vshrl.u32 %v1330, 7
      %v1332 = vsub.s32 0, %v1331
      %v1333 = vrot.slane %v1316, %v1332
      %v1334 = vlaneseq
      %v1335 = vshrl.u32 %v1334, 7
      %v1336 = vsub.s32 0, %v1335
      %v1337 = vrot.slane %v1299, %v1336
      %v1338 = vlaneseq
      %v1339 = vshrl.u32 %v1338, 7
      %v1340 = vsub.s32 0, %v1339
      %v1341 = vrot.slane %v1313, %v1340
      %v1342 = vlaneseq
      %v1343 = vshrl.u32 %v1342, 7
      %v1344 = vsub.s32 0, %v1343
      %v1345 = vrot.slane %v1315, %v1344
      %v1346 = vlaneseq
      %v1347 = vshrl.u32 %v1346, 7
      %v1348 = vsub.s32 0, %v1347
      %v1349 = vrot.slane %v1317, %v1348
      %v1358 = vmul.f32 %v1252, %v1321
      %v1359 = vmul.f32 %v1253, %v1321
      %v1360 = vmul.f32 %v1254, %v1325
      %v1361 = vmul.f32 %v1255, %v1325
      %v1362 = vmul.f32 %v1256, %v1329
      %v1363 = vmul.f32 %v1257, %v1329
      %v1364 = vmul.f32 %v1258, %v1333
      %v1365 = vmul.f32 %v1259, %v1333
      %v1366 = vmul.f32 %v1260, %v1337
      %v1367 = vmul.f32 %v1261, %v1337
      %v1368 = vmul.f32 %v1262, %v1341
      %v1369 = vmul.f32 %v1263, %v1341
      %v1370 = vmul.f32 %v1264, %v1345
      %v1371 = vmul.f32 %v1265, %v1345
      %v1372 = vmul.f32 %v1266, %v1349
      %v1373 = vmul.f32 %v1267, %v1349
      %vm1374 = vcmp.gt.f32.partialorder %v1358, 0.0
      %vm1375 = vcmp.gt.f32.partialorder %v1359, 0.0
      %vm1376 = vcmp.gt.f32.partialorder %v1360, 0.0
      %vm1377 = vcmp.gt.f32.partialorder %v1361, 0.0
      %vm1378 = vcmp.gt.f32.partialorder %v1362, 0.0
      %vm1379 = vcmp.gt.f32.partialorder %v1363, 0.0
      %vm1380 = vcmp.gt.f32.partialorder %v1364, 0.0
      %vm1381 = vcmp.gt.f32.partialorder %v1365, 0.0
      %vm1382 = vcmp.gt.f32.partialorder %v1366, 0.0
      %vm1383 = vcmp.gt.f32.partialorder %v1367, 0.0
      %vm1384 = vcmp.gt.f32.partialorder %v1368, 0.0
      %vm1385 = vcmp.gt.f32.partialorder %v1369, 0.0
      %vm1386 = vcmp.gt.f32.partialorder %v1370, 0.0
      %vm1387 = vcmp.gt.f32.partialorder %v1371, 0.0
      %vm1388 = vcmp.gt.f32.partialorder %v1372, 0.0
      %vm1389 = vcmp.gt.f32.partialorder %v1373, 0.0
      %v1390 = vmul.f32 %v1358, 0.2
      %v1391 = vmul.f32 %v1359, 0.2
      %v1392 = vmul.f32 %v1360, 0.2
      %v1393 = vmul.f32 %v1361, 0.2
      %v1394 = vmul.f32 %v1362, 0.2
      %v1395 = vmul.f32 %v1363, 0.2
      %v1396 = vmul.f32 %v1364, 0.2
      %v1397 = vmul.f32 %v1365, 0.2
      %v1398 = vmul.f32 %v1366, 0.2
      %v1399 = vmul.f32 %v1367, 0.2
      %v1400 = vmul.f32 %v1368, 0.2
      %v1401 = vmul.f32 %v1369, 0.2
      %v1402 = vmul.f32 %v1370, 0.2
      %v1403 = vmul.f32 %v1371, 0.2
      %v1404 = vmul.f32 %v1372, 0.2
      %v1405 = vmul.f32 %v1373, 0.2
      %v1406 = vsel %vm1374, %v1358, %v1390
      %v1407 = vsel %vm1375, %v1359, %v1391
      %v1408 = vsel %vm1376, %v1360, %v1392
      %v1409 = vsel %vm1377, %v1361, %v1393
      %v1410 = vsel %vm1378, %v1362, %v1394
      %v1411 = vsel %vm1379, %v1363, %v1395
      %v1412 = vsel %vm1380, %v1364, %v1396
      %v1413 = vsel %vm1381, %v1365, %v1397
      %v1414 = vsel %vm1382, %v1366, %v1398
      %v1415 = vsel %vm1383, %v1367, %v1399
      %v1416 = vsel %vm1384, %v1368, %v1400
      %v1417 = vsel %vm1385, %v1369, %v1401
      %v1418 = vsel %vm1386, %v1370, %v1402
      %v1419 = vsel %vm1387, %v1371, %v1403
      %v1420 = vsel %vm1388, %v1372, %v1404
      %v1421 = vsel %vm1389, %v1373, %v1405
      %v1422 = vrot.slane %v1406, 7
      %v1423 = vrot.slane %v1407, 7
      %v1424 = vrot.slane %v1408, 7
      %v1425 = vrot.slane %v1409, 7
      %v1426 = vrot.slane %v1410, 7
      %v1427 = vrot.slane %v1411, 7
      %v1428 = vrot.slane %v1412, 7
      %v1429 = vrot.slane %v1413, 7
      %v1430 = vrot.slane %v1414, 7
      %v1431 = vrot.slane %v1415, 7
      %v1432 = vrot.slane %v1416, 7
      %v1433 = vrot.slane %v1417, 7
      %v1434 = vrot.slane %v1418, 7
      %v1435 = vrot.slane %v1419, 7
      %v1436 = vrot.slane %v1420, 7
      %v1437 = vrot.slane %v1421, 7
      %v1438 = vsel %vm495, %v1436, %v1437
      %v1439 = vsel %vm495, %v1435, %v1436
      %v1440 = vsel %vm495, %v1434, %v1435
      %v1441 = vsel %vm495, %v1433, %v1434
      %v1442 = vsel %vm495, %v1432, %v1433
      %v1443 = vsel %vm495, %v1431, %v1432
      %v1444 = vsel %vm495, %v1430, %v1431
      %v1445 = vsel %vm495, %v1429, %v1430
      %v1446 = vsel %vm495, %v1428, %v1429
      %v1447 = vsel %vm495, %v1427, %v1428
      %v1448 = vsel %vm495, %v1426, %v1427
      %v1449 = vsel %vm495, %v1425, %v1426
      %v1450 = vsel %vm495, %v1424, %v1425
      %v1451 = vsel %vm495, %v1423, %v1424
      %v1452 = vsel %vm495, %v1422, %v1423
      %v1453 = vsel %vm495, %v1437, %v1422
      %v1454 = vrot.slane %v1406, 1
      %v1455 = vrot.slane %v1407, 1
      %v1456 = vrot.slane %v1408, 1
      %v1457 = vrot.slane %v1409, 1
      %v1458 = vrot.slane %v1410, 1
      %v1459 = vrot.slane %v1411, 1
      %v1460 = vrot.slane %v1412, 1
      %v1461 = vrot.slane %v1413, 1
      %v1462 = vrot.slane %v1414, 1
      %v1463 = vrot.slane %v1415, 1
      %v1464 = vrot.slane %v1416, 1
      %v1465 = vrot.slane %v1417, 1
      %v1466 = vrot.slane %v1418, 1
      %v1467 = vrot.slane %v1419, 1
      %v1468 = vrot.slane %v1420, 1
      %v1469 = vrot.slane %v1421, 1
      %v1470 = vsel %vm528, %v1468, %v1469
      %v1471 = vsel %vm528, %v1467, %v1468
      %v1472 = vsel %vm528, %v1466, %v1467
      %v1473 = vsel %vm528, %v1465, %v1466
      %v1474 = vsel %vm528, %v1464, %v1465
      %v1475 = vsel %vm528, %v1463, %v1464
      %v1476 = vsel %vm528, %v1462, %v1463
      %v1477 = vsel %vm528, %v1461, %v1462
      %v1478 = vsel %vm528, %v1460, %v1461
      %v1479 = vsel %vm528, %v1459, %v1460
      %v1480 = vsel %vm528, %v1458, %v1459
      %v1481 = vsel %vm528, %v1457, %v1458
      %v1482 = vsel %vm528, %v1456, %v1457
      %v1483 = vsel %vm528, %v1455, %v1456
      %v1484 = vsel %vm528, %v1454, %v1455
      %v1485 = vsel %vm528, %v1469, %v1454
      %v1486 = vsel %vm447, %v1484, %v1453
      %v1487 = vsel %vm448, %v1483, %v1452
      %v1488 = vsel %vm449, %v1482, %v1451
      %v1489 = vsel %vm450, %v1481, %v1450
      %v1490 = vsel %vm451, %v1480, %v1449
      %v1491 = vsel %vm452, %v1479, %v1448
      %v1492 = vsel %vm453, %v1478, %v1447
      %v1493 = vsel %vm454, %v1477, %v1446
      %v1494 = vsel %vm455, %v1476, %v1445
      %v1495 = vsel %vm456, %v1475, %v1444
      %v1496 = vsel %vm457, %v1474, %v1443
      %v1497 = vsel %vm458, %v1473, %v1442
      %v1498 = vsel %vm459, %v1472, %v1441
      %v1499 = vsel %vm460, %v1471, %v1440
      %v1500 = vsel %vm461, %v1470, %v1439
      %v1501 = vsel %vm462, %v1485, %v1438
      %v1502 = vsel %vm463, %v1453, %v1484
      %v1503 = vsel %vm464, %v1452, %v1483
      %v1504 = vsel %vm465, %v1451, %v1482
      %v1505 = vsel %vm466, %v1450, %v1481
      %v1506 = vsel %vm467, %v1449, %v1480
      %v1507 = vsel %vm468, %v1448, %v1479
      %v1508 = vsel %vm469, %v1447, %v1478
      %v1509 = vsel %vm470, %v1446, %v1477
      %v1510 = vsel %vm471, %v1445, %v1476
      %v1511 = vsel %vm472, %v1444, %v1475
      %v1512 = vsel %vm473, %v1443, %v1474
      %v1513 = vsel %vm474, %v1442, %v1473
      %v1514 = vsel %vm475, %v1441, %v1472
      %v1515 = vsel %vm476, %v1440, %v1471
      %v1516 = vsel %vm477, %v1439, %v1470
      %v1517 = vsel %vm478, %v1438, %v1485
      %v1518 = vld [vmem:[%s2] sm:$0xff]
      %v1519 = vld [vmem:[%s2 + $0x8] sm:$0xff]
      %v1520 = vld [vmem:[%s2 + $0x10] sm:$0xff]
      %v1521 = vld [vmem:[%s2 + $0x18] sm:$0xff]
      %v1522 = vld [vmem:[%s2 + $0x20] sm:$0xff]
      %v1523 = vld [vmem:[%s2 + $0x28] sm:$0xff]
      %v1524 = vld [vmem:[%s2 + $0x30] sm:$0xff]
      %v1525 = vld [vmem:[%s2 + $0x38] sm:$0xff]
      %v1526 = vld [vmem:[%s2 + $0x40] sm:$0xff]
      %v1527 = vld [vmem:[%s2 + $0x48] sm:$0xff]
      %v1528 = vld [vmem:[%s2 + $0x50] sm:$0xff]
      %v1529 = vld [vmem:[%s2 + $0x58] sm:$0xff]
      %v1530 = vld [vmem:[%s2 + $0x60] sm:$0xff]
      %v1531 = vld [vmem:[%s2 + $0x68] sm:$0xff]
      %v1532 = vld [vmem:[%s2 + $0x70] sm:$0xff]
      %v1533 = vld [vmem:[%s2 + $0x78] sm:$0xff]
      %v1534 = vld [vmem:[%s2 + $0x80] sm:$0xff]
      %v1535 = vld [vmem:[%s2 + $0x88] sm:$0xff]
      %v1536 = vld [vmem:[%s2 + $0x90] sm:$0xff]
      %v1537 = vld [vmem:[%s2 + $0x98] sm:$0xff]
      %v1538 = vld [vmem:[%s2 + $0xa0] sm:$0xff]
      %v1539 = vld [vmem:[%s2 + $0xa8] sm:$0xff]
      %v1540 = vld [vmem:[%s2 + $0xb0] sm:$0xff]
      %v1541 = vld [vmem:[%s2 + $0xb8] sm:$0xff]
      %v1542 = vld [vmem:[%s2 + $0xc0] sm:$0xff]
      %v1543 = vld [vmem:[%s2 + $0xc8] sm:$0xff]
      %v1544 = vld [vmem:[%s2 + $0xd0] sm:$0xff]
      %v1545 = vld [vmem:[%s2 + $0xd8] sm:$0xff]
      %v1546 = vld [vmem:[%s2 + $0xe0] sm:$0xff]
      %v1547 = vld [vmem:[%s2 + $0xe8] sm:$0xff]
      %v1548 = vld [vmem:[%s2 + $0xf0] sm:$0xff]
      %v1549 = vld [vmem:[%s2 + $0xf8] sm:$0xff]
      %v1550 = vld [vmem:[%s2 + $0x100] sm:$0xff]
      %v1551 = vld [vmem:[%s2 + $0x108] sm:$0xff]
      %v1552 = vld [vmem:[%s2 + $0x110] sm:$0xff]
      %v1553 = vld [vmem:[%s2 + $0x118] sm:$0xff]
      %v1554 = vld [vmem:[%s2 + $0x120] sm:$0xff]
      %v1555 = vld [vmem:[%s2 + $0x128] sm:$0xff]
      %v1556 = vld [vmem:[%s2 + $0x130] sm:$0xff]
      %v1557 = vld [vmem:[%s2 + $0x138] sm:$0xff]
      %v1558 = vld [vmem:[%s2 + $0x140] sm:$0xff]
      %v1559 = vld [vmem:[%s2 + $0x148] sm:$0xff]
      %v1560 = vld [vmem:[%s2 + $0x150] sm:$0xff]
      %v1561 = vld [vmem:[%s2 + $0x158] sm:$0xff]
      %v1562 = vld [vmem:[%s2 + $0x160] sm:$0xff]
      %v1563 = vld [vmem:[%s2 + $0x168] sm:$0xff]
      %v1564 = vld [vmem:[%s2 + $0x170] sm:$0xff]
      %v1565 = vld [vmem:[%s2 + $0x178] sm:$0xff]
      %1566 = vmatprep.subr.mxu0 0.0
      %1567 = vmatpush1.msra.mxu0 %v1533
      %1568 = vmatprep.subr.mxu0 0.0
      %1569 = vmatpush1.msra.mxu0 %v1532
      %1570 = vmatprep.subr.mxu0 0.0
      %1571 = vmatpush1.msra.mxu0 %v1531
      %1572 = vmatprep.subr.mxu0 0.0
      %1573 = vmatpush1.msra.mxu0 %v1530
      %1574 = vmatprep.subr.mxu0 0.0
      %1575 = vmatpush1.msra.mxu0 %v1529
      %1576 = vmatprep.subr.mxu0 0.0
      %1577 = vmatpush1.msra.mxu0 %v1528
      %1578 = vmatprep.subr.mxu0 0.0
      %1579 = vmatpush1.msra.mxu0 %v1527
      %1580 = vmatprep.subr.mxu0 0.0
      %1581 = vmatpush1.msra.mxu0 %v1526
      %1582 = vmatprep.subr.mxu0 0.0
      %1583 = vmatpush1.msra.mxu0 %v1525
      %1584 = vmatprep.subr.mxu0 0.0
      %1585 = vmatpush1.msra.mxu0 %v1524
      %1586 = vmatprep.subr.mxu0 0.0
      %1587 = vmatpush1.msra.mxu0 %v1523
      %1588 = vmatprep.subr.mxu0 0.0
      %1589 = vmatpush1.msra.mxu0 %v1522
      %1590 = vmatprep.subr.mxu0 0.0
      %1591 = vmatpush1.msra.mxu0 %v1521
      %1592 = vmatprep.subr.mxu0 0.0
      %1593 = vmatpush1.msra.mxu0 %v1520
      %1594 = vmatprep.subr.mxu0 0.0
      %1595 = vmatpush1.msra.mxu0 %v1519
      %1596 = vmatprep.subr.mxu0 0.0
      %1597 = vmatpush1.msra.mxu0 %v1518
      %1598 = vmatprep.subr.mxu0 0.0
      %1599 = vmatpush2.msra.mxu0 %v1549
      %1600 = vmatprep.subr.mxu0 0.0
      %1601 = vmatpush2.msra.mxu0 %v1548
      %1602 = vmatprep.subr.mxu0 0.0
      %1603 = vmatpush2.msra.mxu0 %v1547
      %1604 = vmatprep.subr.mxu0 0.0
      %1605 = vmatpush2.msra.mxu0 %v1546
      %1606 = vmatprep.subr.mxu0 0.0
      %1607 = vmatpush2.msra.mxu0 %v1545
      %1608 = vmatprep.subr.mxu0 0.0
      %1609 = vmatpush2.msra.mxu0 %v1544
      %1610 = vmatprep.subr.mxu0 0.0
      %1611 = vmatpush2.msra.mxu0 %v1543
      %1612 = vmatprep.subr.mxu0 0.0
      %1613 = vmatpush2.msra.mxu0 %v1542
      %1614 = vmatprep.subr.mxu0 0.0
      %1615 = vmatpush2.msra.mxu0 %v1541
      %1616 = vmatprep.subr.mxu0 0.0
      %1617 = vmatpush2.msra.mxu0 %v1540
      %1618 = vmatprep.subr.mxu0 0.0
      %1619 = vmatpush2.msra.mxu0 %v1539
      %1620 = vmatprep.subr.mxu0 0.0
      %1621 = vmatpush2.msra.mxu0 %v1538
      %1622 = vmatprep.subr.mxu0 0.0
      %1623 = vmatpush2.msra.mxu0 %v1537
      %1624 = vmatprep.subr.mxu0 0.0
      %1625 = vmatpush2.msra.mxu0 %v1536
      %1626 = vmatprep.subr.mxu0 0.0
      %1627 = vmatpush2.msra.mxu0 %v1535
      %1628 = vmatprep.subr.mxu0 0.0
      %1629 = vmatpush2.msra.mxu0 %v1534
      %1630 = vmatprep.mubr.f32.mxu0 %v1406
      %1631 = vmatmul.mubr.f32.gmra.mxu0 %v1486
      %v1632 = vpop.f32.mrf.mxu0
      %v1633 = vadd.f32 0.0, %v1632
      %v1634 = vpop.f32.mrf.mxu0
      %1635 = vmatprep.mubr.f32.mxu0 %v1407
      %1636 = vmatmul.mubr.f32.gmra.mxu0 %v1487
      %v1637 = vpop.f32.mrf.mxu0
      %v1638 = vadd.f32 0.0, %v1637
      %v1639 = vpop.f32.mrf.mxu0
      %1640 = vmatprep.mubr.f32.mxu0 %v1408
      %1641 = vmatmul.mubr.f32.gmra.mxu0 %v1488
      %v1642 = vpop.f32.mrf.mxu0
      %v1643 = vadd.f32 0.0, %v1642
      %v1644 = vpop.f32.mrf.mxu0
      %1645 = vmatprep.mubr.f32.mxu0 %v1409
      %1646 = vmatmul.mubr.f32.gmra.mxu0 %v1489
      %v1647 = vpop.f32.mrf.mxu0
      %v1648 = vadd.f32 0.0, %v1647
      %v1649 = vpop.f32.mrf.mxu0
      %1650 = vmatprep.mubr.f32.mxu0 %v1410
      %1651 = vmatmul.mubr.f32.gmra.mxu0 %v1490
      %v1652 = vpop.f32.mrf.mxu0
      %v1653 = vadd.f32 0.0, %v1652
      %v1654 = vpop.f32.mrf.mxu0
      %1655 = vmatprep.mubr.f32.mxu0 %v1411
      %1656 = vmatmul.mubr.f32.gmra.mxu0 %v1491
      %v1657 = vpop.f32.mrf.mxu0
      %v1658 = vadd.f32 0.0, %v1657
      %v1659 = vpop.f32.mrf.mxu0
      %1660 = vmatprep.mubr.f32.mxu0 %v1412
      %1661 = vmatmul.mubr.f32.gmra.mxu0 %v1492
      %v1662 = vpop.f32.mrf.mxu0
      %v1663 = vadd.f32 0.0, %v1662
      %v1664 = vpop.f32.mrf.mxu0
      %1665 = vmatprep.mubr.f32.mxu0 %v1413
      %1666 = vmatmul.mubr.f32.gmra.mxu0 %v1493
      %v1667 = vpop.f32.mrf.mxu0
      %v1668 = vadd.f32 0.0, %v1667
      %v1669 = vpop.f32.mrf.mxu0
      %1670 = vmatprep.mubr.f32.mxu0 %v1414
      %1671 = vmatmul.mubr.f32.gmra.mxu0 %v1494
      %v1672 = vpop.f32.mrf.mxu0
      %v1673 = vadd.f32 0.0, %v1672
      %v1674 = vpop.f32.mrf.mxu0
      %1675 = vmatprep.mubr.f32.mxu0 %v1415
      %1676 = vmatmul.mubr.f32.gmra.mxu0 %v1495
      %v1677 = vpop.f32.mrf.mxu0
      %v1678 = vadd.f32 0.0, %v1677
      %v1679 = vpop.f32.mrf.mxu0
      %1680 = vmatprep.mubr.f32.mxu0 %v1416
      %1681 = vmatmul.mubr.f32.gmra.mxu0 %v1496
      %v1682 = vpop.f32.mrf.mxu0
      %v1683 = vadd.f32 0.0, %v1682
      %v1684 = vpop.f32.mrf.mxu0
      %1685 = vmatprep.mubr.f32.mxu0 %v1417
      %1686 = vmatmul.mubr.f32.gmra.mxu0 %v1497
      %v1687 = vpop.f32.mrf.mxu0
      %v1688 = vadd.f32 0.0, %v1687
      %v1689 = vpop.f32.mrf.mxu0
      %1690 = vmatprep.mubr.f32.mxu0 %v1418
      %1691 = vmatmul.mubr.f32.gmra.mxu0 %v1498
      %v1692 = vpop.f32.mrf.mxu0
      %v1693 = vadd.f32 0.0, %v1692
      %v1694 = vpop.f32.mrf.mxu0
      %1695 = vmatprep.mubr.f32.mxu0 %v1419
      %1696 = vmatmul.mubr.f32.gmra.mxu0 %v1499
      %v1697 = vpop.f32.mrf.mxu0
      %v1698 = vadd.f32 0.0, %v1697
      %v1699 = vpop.f32.mrf.mxu0
      %1700 = vmatprep.mubr.f32.mxu0 %v1420
      %1701 = vmatmul.mubr.f32.gmra.mxu0 %v1500
      %v1702 = vpop.f32.mrf.mxu0
      %v1703 = vadd.f32 0.0, %v1702
      %v1704 = vpop.f32.mrf.mxu0
      %1705 = vmatprep.mubr.f32.mxu0 %v1421
      %1706 = vmatmul.mubr.f32.gmra.mxu0 %v1501
      %v1707 = vpop.f32.mrf.mxu0
      %v1708 = vadd.f32 0.0, %v1707
      %v1709 = vpop.f32.mrf.mxu0
      %1710 = vdwg.mxu0
      %1711 = vmatprep.subr.mxu0 0.0
      %1712 = vmatpush1.msra.mxu0 %v1565
      %1713 = vmatprep.subr.mxu0 0.0
      %1714 = vmatpush1.msra.mxu0 %v1564
      %1715 = vmatprep.subr.mxu0 0.0
      %1716 = vmatpush1.msra.mxu0 %v1563
      %1717 = vmatprep.subr.mxu0 0.0
      %1718 = vmatpush1.msra.mxu0 %v1562
      %1719 = vmatprep.subr.mxu0 0.0
      %1720 = vmatpush1.msra.mxu0 %v1561
      %1721 = vmatprep.subr.mxu0 0.0
      %1722 = vmatpush1.msra.mxu0 %v1560
      %1723 = vmatprep.subr.mxu0 0.0
      %1724 = vmatpush1.msra.mxu0 %v1559
      %1725 = vmatprep.subr.mxu0 0.0
      %1726 = vmatpush1.msra.mxu0 %v1558
      %1727 = vmatprep.subr.mxu0 0.0
      %1728 = vmatpush1.msra.mxu0 %v1557
      %1729 = vmatprep.subr.mxu0 0.0
      %1730 = vmatpush1.msra.mxu0 %v1556
      %1731 = vmatprep.subr.mxu0 0.0
      %1732 = vmatpush1.msra.mxu0 %v1555
      %1733 = vmatprep.subr.mxu0 0.0
      %1734 = vmatpush1.msra.mxu0 %v1554
      %1735 = vmatprep.subr.mxu0 0.0
      %1736 = vmatpush1.msra.mxu0 %v1553
      %1737 = vmatprep.subr.mxu0 0.0
      %1738 = vmatpush1.msra.mxu0 %v1552
      %1739 = vmatprep.subr.mxu0 0.0
      %1740 = vmatpush1.msra.mxu0 %v1551
      %1741 = vmatprep.subr.mxu0 0.0
      %1742 = vmatpush1.msra.mxu0 %v1550
      %1743 = vmatprep.subr.mxu0 0.0
      %1744 = vmatpush2.msra.mxu0 0.0
      %1745 = vmatprep.subr.mxu0 0.0
      %1746 = vmatpush2.msra.mxu0 0.0
      %1747 = vmatprep.subr.mxu0 0.0
      %1748 = vmatpush2.msra.mxu0 0.0
      %1749 = vmatprep.subr.mxu0 0.0
      %1750 = vmatpush2.msra.mxu0 0.0
      %1751 = vmatprep.subr.mxu0 0.0
      %1752 = vmatpush2.msra.mxu0 0.0
      %1753 = vmatprep.subr.mxu0 0.0
      %1754 = vmatpush2.msra.mxu0 0.0
      %1755 = vmatprep.subr.mxu0 0.0
      %1756 = vmatpush2.msra.mxu0 0.0
      %1757 = vmatprep.subr.mxu0 0.0
      %1758 = vmatpush2.msra.mxu0 0.0
      %1759 = vmatprep.subr.mxu0 0.0
      %1760 = vmatpush2.msra.mxu0 0.0
      %1761 = vmatprep.subr.mxu0 0.0
      %1762 = vmatpush2.msra.mxu0 0.0
      %1763 = vmatprep.subr.mxu0 0.0
      %1764 = vmatpush2.msra.mxu0 0.0
      %1765 = vmatprep.subr.mxu0 0.0
      %1766 = vmatpush2.msra.mxu0 0.0
      %1767 = vmatprep.subr.mxu0 0.0
      %1768 = vmatpush2.msra.mxu0 0.0
      %1769 = vmatprep.subr.mxu0 0.0
      %1770 = vmatpush2.msra.mxu0 0.0
      %1771 = vmatprep.subr.mxu0 0.0
      %1772 = vmatpush2.msra.mxu0 0.0
      %1773 = vmatprep.subr.mxu0 0.0
      %1774 = vmatpush2.msra.mxu0 0.0
      %1775 = vmatprep.mubr.f32.mxu0 0.0
      %1776 = vmatmul.mubr.f32.gmra.mxu0 %v1502
      %v1777 = vpop.f32.mrf.mxu0
      %v1778 = vadd.f32 %v1633, %v1777
      %v1779 = vpop.f32.mrf.mxu0
      %1780 = vmatprep.mubr.f32.mxu0 0.0
      %1781 = vmatmul.mubr.f32.gmra.mxu0 %v1503
      %v1782 = vpop.f32.mrf.mxu0
      %v1783 = vadd.f32 %v1638, %v1782
      %v1784 = vpop.f32.mrf.mxu0
      %1785 = vmatprep.mubr.f32.mxu0 0.0
      %1786 = vmatmul.mubr.f32.gmra.mxu0 %v1504
      %v1787 = vpop.f32.mrf.mxu0
      %v1788 = vadd.f32 %v1643, %v1787
      %v1789 = vpop.f32.mrf.mxu0
      %1790 = vmatprep.mubr.f32.mxu0 0.0
      %1791 = vmatmul.mubr.f32.gmra.mxu0 %v1505
      %v1792 = vpop.f32.mrf.mxu0
      %v1793 = vadd.f32 %v1648, %v1792
      %v1794 = vpop.f32.mrf.mxu0
      %1795 = vmatprep.mubr.f32.mxu0 0.0
      %1796 = vmatmul.mubr.f32.gmra.mxu0 %v1506
      %v1797 = vpop.f32.mrf.mxu0
      %v1798 = vadd.f32 %v1653, %v1797
      %v1799 = vpop.f32.mrf.mxu0
      %1800 = vmatprep.mubr.f32.mxu0 0.0
      %1801 = vmatmul.mubr.f32.gmra.mxu0 %v1507
      %v1802 = vpop.f32.mrf.mxu0
      %v1803 = vadd.f32 %v1658, %v1802
      %v1804 = vpop.f32.mrf.mxu0
      %1805 = vmatprep.mubr.f32.mxu0 0.0
      %1806 = vmatmul.mubr.f32.gmra.mxu0 %v1508
      %v1807 = vpop.f32.mrf.mxu0
      %v1808 = vadd.f32 %v1663, %v1807
      %v1809 = vpop.f32.mrf.mxu0
      %1810 = vmatprep.mubr.f32.mxu0 0.0
      %1811 = vmatmul.mubr.f32.gmra.mxu0 %v1509
      %v1812 = vpop.f32.mrf.mxu0
      %v1813 = vadd.f32 %v1668, %v1812
      %v1814 = vpop.f32.mrf.mxu0
      %1815 = vmatprep.mubr.f32.mxu0 0.0
      %1816 = vmatmul.mubr.f32.gmra.mxu0 %v1510
      %v1817 = vpop.f32.mrf.mxu0
      %v1818 = vadd.f32 %v1673, %v1817
      %v1819 = vpop.f32.mrf.mxu0
      %1820 = vmatprep.mubr.f32.mxu0 0.0
      %1821 = vmatmul.mubr.f32.gmra.mxu0 %v1511
      %v1822 = vpop.f32.mrf.mxu0
      %v1823 = vadd.f32 %v1678, %v1822
      %v1824 = vpop.f32.mrf.mxu0
      %1825 = vmatprep.mubr.f32.mxu0 0.0
      %1826 = vmatmul.mubr.f32.gmra.mxu0 %v1512
      %v1827 = vpop.f32.mrf.mxu0
      %v1828 = vadd.f32 %v1683, %v1827
      %v1829 = vpop.f32.mrf.mxu0
      %1830 = vmatprep.mubr.f32.mxu0 0.0
      %1831 = vmatmul.mubr.f32.gmra.mxu0 %v1513
      %v1832 = vpop.f32.mrf.mxu0
      %v1833 = vadd.f32 %v1688, %v1832
      %v1834 = vpop.f32.mrf.mxu0
      %1835 = vmatprep.mubr.f32.mxu0 0.0
      %1836 = vmatmul.mubr.f32.gmra.mxu0 %v1514
      %v1837 = vpop.f32.mrf.mxu0
      %v1838 = vadd.f32 %v1693, %v1837
      %v1839 = vpop.f32.mrf.mxu0
      %1840 = vmatprep.mubr.f32.mxu0 0.0
      %1841 = vmatmul.mubr.f32.gmra.mxu0 %v1515
      %v1842 = vpop.f32.mrf.mxu0
      %v1843 = vadd.f32 %v1698, %v1842
      %v1844 = vpop.f32.mrf.mxu0
      %1845 = vmatprep.mubr.f32.mxu0 0.0
      %1846 = vmatmul.mubr.f32.gmra.mxu0 %v1516
      %v1847 = vpop.f32.mrf.mxu0
      %v1848 = vadd.f32 %v1703, %v1847
      %v1849 = vpop.f32.mrf.mxu0
      %1850 = vmatprep.mubr.f32.mxu0 0.0
      %1851 = vmatmul.mubr.f32.gmra.mxu0 %v1517
      %v1852 = vpop.f32.mrf.mxu0
      %v1853 = vadd.f32 %v1708, %v1852
      %v1854 = vpop.f32.mrf.mxu0
      %1855 = vdwg.mxu0
      %v1856 = vadd.f32 %v1778, %v1783
      %v1857 = vrot.slane %v1856, 4
      %v1858 = vadd.f32 %v1856, %v1857
      %v1859 = vrot.slane %v1858, 2
      %v1860 = vadd.f32 %v1858, %v1859
      %v1861 = vrot.slane %v1860, 1
      %v1862 = vadd.f32 %v1860, %v1861
      %v1863 = vadd.f32 %v1788, %v1793
      %v1864 = vrot.slane %v1863, 4
      %v1865 = vadd.f32 %v1863, %v1864
      %v1866 = vrot.slane %v1865, 2
      %v1867 = vadd.f32 %v1865, %v1866
      %v1868 = vrot.slane %v1867, 1
      %v1869 = vadd.f32 %v1867, %v1868
      %v1870 = vadd.f32 %v1798, %v1803
      %v1871 = vrot.slane %v1870, 4
      %v1872 = vadd.f32 %v1870, %v1871
      %v1873 = vrot.slane %v1872, 2
      %v1874 = vadd.f32 %v1872, %v1873
      %v1875 = vrot.slane %v1874, 1
      %v1876 = vadd.f32 %v1874, %v1875
      %v1877 = vadd.f32 %v1808, %v1813
      %v1878 = vrot.slane %v1877, 4
      %v1879 = vadd.f32 %v1877, %v1878
      %v1880 = vrot.slane %v1879, 2
      %v1881 = vadd.f32 %v1879, %v1880
      %v1882 = vrot.slane %v1881, 1
      %v1883 = vadd.f32 %v1881, %v1882
      %v1884 = vadd.f32 %v1818, %v1823
      %v1885 = vrot.slane %v1884, 4
      %v1886 = vadd.f32 %v1884, %v1885
      %v1887 = vrot.slane %v1886, 2
      %v1888 = vadd.f32 %v1886, %v1887
      %v1889 = vrot.slane %v1888, 1
      %v1890 = vadd.f32 %v1888, %v1889
      %v1891 = vadd.f32 %v1828, %v1833
      %v1892 = vrot.slane %v1891, 4
      %v1893 = vadd.f32 %v1891, %v1892
      %v1894 = vrot.slane %v1893, 2
      %v1895 = vadd.f32 %v1893, %v1894
      %v1896 = vrot.slane %v1895, 1
      %v1897 = vadd.f32 %v1895, %v1896
      %v1898 = vadd.f32 %v1838, %v1843
      %v1899 = vrot.slane %v1898, 4
      %v1900 = vadd.f32 %v1898, %v1899
      %v1901 = vrot.slane %v1900, 2
      %v1902 = vadd.f32 %v1900, %v1901
      %v1903 = vrot.slane %v1902, 1
      %v1904 = vadd.f32 %v1902, %v1903
      %v1905 = vadd.f32 %v1848, %v1853
      %v1906 = vrot.slane %v1905, 4
      %v1907 = vadd.f32 %v1905, %v1906
      %v1908 = vrot.slane %v1907, 2
      %v1909 = vadd.f32 %v1907, %v1908
      %v1910 = vrot.slane %v1909, 1
      %v1911 = vadd.f32 %v1909, %v1910
      %v1912 = vmul.f32 %v1778, %v1778
      %v1913 = vmul.f32 %v1783, %v1783
      %v1914 = vmul.f32 %v1788, %v1788
      %v1915 = vmul.f32 %v1793, %v1793
      %v1916 = vmul.f32 %v1798, %v1798
      %v1917 = vmul.f32 %v1803, %v1803
      %v1918 = vmul.f32 %v1808, %v1808
      %v1919 = vmul.f32 %v1813, %v1813
      %v1920 = vmul.f32 %v1818, %v1818
      %v1921 = vmul.f32 %v1823, %v1823
      %v1922 = vmul.f32 %v1828, %v1828
      %v1923 = vmul.f32 %v1833, %v1833
      %v1924 = vmul.f32 %v1838, %v1838
      %v1925 = vmul.f32 %v1843, %v1843
      %v1926 = vmul.f32 %v1848, %v1848
      %v1927 = vmul.f32 %v1853, %v1853
      %v1928 = vadd.f32 %v1912, %v1913
      %v1929 = vrot.slane %v1928, 4
      %v1930 = vadd.f32 %v1928, %v1929
      %v1931 = vrot.slane %v1930, 2
      %v1932 = vadd.f32 %v1930, %v1931
      %v1933 = vrot.slane %v1932, 1
      %v1934 = vadd.f32 %v1932, %v1933
      %v1935 = vadd.f32 %v1914, %v1915
      %v1936 = vrot.slane %v1935, 4
      %v1937 = vadd.f32 %v1935, %v1936
      %v1938 = vrot.slane %v1937, 2
      %v1939 = vadd.f32 %v1937, %v1938
      %v1940 = vrot.slane %v1939, 1
      %v1941 = vadd.f32 %v1939, %v1940
      %v1942 = vadd.f32 %v1916, %v1917
      %v1943 = vrot.slane %v1942, 4
      %v1944 = vadd.f32 %v1942, %v1943
      %v1945 = vrot.slane %v1944, 2
      %v1946 = vadd.f32 %v1944, %v1945
      %v1947 = vrot.slane %v1946, 1
      %v1948 = vadd.f32 %v1946, %v1947
      %v1949 = vadd.f32 %v1918, %v1919
      %v1950 = vrot.slane %v1949, 4
      %v1951 = vadd.f32 %v1949, %v1950
      %v1952 = vrot.slane %v1951, 2
      %v1953 = vadd.f32 %v1951, %v1952
      %v1954 = vrot.slane %v1953, 1
      %v1955 = vadd.f32 %v1953, %v1954
      %v1956 = vadd.f32 %v1920, %v1921
      %v1957 = vrot.slane %v1956, 4
      %v1958 = vadd.f32 %v1956, %v1957
      %v1959 = vrot.slane %v1958, 2
      %v1960 = vadd.f32 %v1958, %v1959
      %v1961 = vrot.slane %v1960, 1
      %v1962 = vadd.f32 %v1960, %v1961
      %v1963 = vadd.f32 %v1922, %v1923
      %v1964 = vrot.slane %v1963, 4
      %v1965 = vadd.f32 %v1963, %v1964
      %v1966 = vrot.slane %v1965, 2
      %v1967 = vadd.f32 %v1965, %v1966
      %v1968 = vrot.slane %v1967, 1
      %v1969 = vadd.f32 %v1967, %v1968
      %v1970 = vadd.f32 %v1924, %v1925
      %v1971 = vrot.slane %v1970, 4
      %v1972 = vadd.f32 %v1970, %v1971
      %v1973 = vrot.slane %v1972, 2
      %v1974 = vadd.f32 %v1972, %v1973
      %v1975 = vrot.slane %v1974, 1
      %v1976 = vadd.f32 %v1974, %v1975
      %v1977 = vadd.f32 %v1926, %v1927
      %v1978 = vrot.slane %v1977, 4
      %v1979 = vadd.f32 %v1977, %v1978
      %v1980 = vrot.slane %v1979, 2
      %v1981 = vadd.f32 %v1979, %v1980
      %v1982 = vrot.slane %v1981, 1
      %v1983 = vadd.f32 %v1981, %v1982
      %v1992 = vsel %vm1051, %v1869, %v1862
      %v1993 = vsel %vm1053, %v1876, %v1992
      %v1994 = vsel %vm1055, %v1883, %v1993
      %v1995 = vsel %vm1057, %v1890, %v1994
      %v1996 = vsel %vm1059, %v1897, %v1995
      %v1997 = vsel %vm1061, %v1904, %v1996
      %v1998 = vsel %vm1063, %v1911, %v1997
      %v2008 = vsel %vm1051, %v1941, %v1934
      %v2009 = vsel %vm1053, %v1948, %v2008
      %v2010 = vsel %vm1055, %v1955, %v2009
      %v2011 = vsel %vm1057, %v1962, %v2010
      %v2012 = vsel %vm1059, %v1969, %v2011
      %v2013 = vsel %vm1061, %v1976, %v2012
      %v2014 = vsel %vm1063, %v1983, %v2013
      %2016 = vmatprep.subr.mxu0 0.0
      %2017 = vmatpush1.msra.mxu0 %v237
      %2018 = vmatprep.subr.mxu0 0.0
      %2019 = vmatpush1.msra.mxu0 %v236
      %2020 = vmatprep.subr.mxu0 0.0
      %2021 = vmatpush1.msra.mxu0 %v235
      %2022 = vmatprep.subr.mxu0 0.0
      %2023 = vmatpush1.msra.mxu0 %v234
      %2024 = vmatprep.subr.mxu0 0.0
      %2025 = vmatpush1.msra.mxu0 %v233
      %2026 = vmatprep.subr.mxu0 0.0
      %2027 = vmatpush1.msra.mxu0 %v232
      %2028 = vmatprep.subr.mxu0 0.0
      %2029 = vmatpush1.msra.mxu0 %v231
      %2030 = vmatprep.subr.mxu0 0.0
      %2031 = vmatpush1.msra.mxu0 %v230
      %2032 = vmatprep.subr.mxu0 0.0
      %2033 = vmatpush1.msra.mxu0 %v229
      %2034 = vmatprep.subr.mxu0 0.0
      %2035 = vmatpush1.msra.mxu0 %v228
      %2036 = vmatprep.subr.mxu0 0.0
      %2037 = vmatpush1.msra.mxu0 %v227
      %2038 = vmatprep.subr.mxu0 0.0
      %2039 = vmatpush1.msra.mxu0 %v226
      %2040 = vmatprep.subr.mxu0 0.0
      %2041 = vmatpush1.msra.mxu0 %v225
      %2042 = vmatprep.subr.mxu0 0.0
      %2043 = vmatpush1.msra.mxu0 %v224
      %2044 = vmatprep.subr.mxu0 0.0
      %2045 = vmatpush1.msra.mxu0 %v223
      %2046 = vmatprep.subr.mxu0 0.0
      %2047 = vmatpush1.msra.mxu0 %v222
      %2048 = vmatprep.subr.mxu0 0.0
      %2049 = vmatpush2.msra.mxu0 0.0
      %2050 = vmatprep.subr.mxu0 0.0
      %2051 = vmatpush2.msra.mxu0 0.0
      %2052 = vmatprep.subr.mxu0 0.0
      %2053 = vmatpush2.msra.mxu0 0.0
      %2054 = vmatprep.subr.mxu0 0.0
      %2055 = vmatpush2.msra.mxu0 0.0
      %2056 = vmatprep.subr.mxu0 0.0
      %2057 = vmatpush2.msra.mxu0 0.0
      %2058 = vmatprep.subr.mxu0 0.0
      %2059 = vmatpush2.msra.mxu0 0.0
      %2060 = vmatprep.subr.mxu0 0.0
      %2061 = vmatpush2.msra.mxu0 0.0
      %2062 = vmatprep.subr.mxu0 0.0
      %2063 = vmatpush2.msra.mxu0 0.0
      %2064 = vmatprep.subr.mxu0 0.0
      %2065 = vmatpush2.msra.mxu0 0.0
      %2066 = vmatprep.subr.mxu0 0.0
      %2067 = vmatpush2.msra.mxu0 0.0
      %2068 = vmatprep.subr.mxu0 0.0
      %2069 = vmatpush2.msra.mxu0 0.0
      %2070 = vmatprep.subr.mxu0 0.0
      %2071 = vmatpush2.msra.mxu0 0.0
      %2072 = vmatprep.subr.mxu0 0.0
      %2073 = vmatpush2.msra.mxu0 0.0
      %2074 = vmatprep.subr.mxu0 0.0
      %2075 = vmatpush2.msra.mxu0 0.0
      %2076 = vmatprep.subr.mxu0 0.0
      %2077 = vmatpush2.msra.mxu0 0.0
      %2078 = vmatprep.subr.mxu0 0.0
      %2079 = vmatpush2.msra.mxu0 0.0
      %2080 = vmatprep.mubr.f32.mxu0 0.0
      %2081 = vmatmul.mubr.f32.gmra.mxu0 %v1998
      %v2082 = vpop.f32.mrf.mxu0
      %v2083 = vadd.f32 0.0, %v2082
      %v2084 = vpop.f32.mrf.mxu0
      %2085 = vmatprep.mubr.f32.mxu0 0.0
      %2086 = vmatmul.mubr.f32.gmra.mxu0 %v2014
      %v2087 = vpop.f32.mrf.mxu0
      %v2088 = vadd.f32 0.0, %v2087
      %v2089 = vpop.f32.mrf.mxu0
      %2090 = vdwg.mxu0
      %v2091 = vmul.f32 %v2083, %v2083
      %v2092 = vsub.f32 %v2088, %v2091
      %v2093 = vmax.f32 %v2092, 0.0
      %v2094 = vadd.f32 %v2093, 1e-05
      %v2095 = vrsqrt.pop %v2094
      %v2097 = vcombine.high %v2083, %v2083
      %v2099 = vunpack.c.l.s4 1966171168
      %v2100 = vunpack.c.0.s8 %v2099
      %v2101 = vlaneseq
      %v2102 = vshrl.u32 %v2101, 7
      %v2103 = vsub.s32 %v2100, %v2102
      %v2104 = vrot.slane %v2083, %v2103
      %v2106 = vunpack.c.l.s4 1966171168
      %v2107 = vunpack.c.0.s8 %v2106
      %v2108 = vlaneseq
      %v2109 = vshrl.u32 %v2108, 7
      %v2110 = vsub.s32 %v2107, %v2109
      %v2111 = vrot.slane %v2097, %v2110
      %v2112 = vcombine.high %v2104, %v2104
      %v2113 = vcombine.high %v2111, %v2111
      %v2115 = vunpack.c.l.s4 1966171168
      %v2116 = vunpack.c.0.s8 %v2115
      %v2117 = vlaneseq
      %v2118 = vshrl.u32 %v2117, 7
      %v2119 = vsub.s32 %v2116, %v2118
      %v2120 = vrot.slane %v2104, %v2119
      %v2122 = vunpack.c.l.s4 1966171168
      %v2123 = vunpack.c.0.s8 %v2122
      %v2124 = vlaneseq
      %v2125 = vshrl.u32 %v2124, 7
      %v2126 = vsub.s32 %v2123, %v2125
      %v2127 = vrot.slane %v2111, %v2126
      %v2129 = vunpack.c.l.s4 1966171168
      %v2130 = vunpack.c.0.s8 %v2129
      %v2131 = vlaneseq
      %v2132 = vshrl.u32 %v2131, 7
      %v2133 = vsub.s32 %v2130, %v2132
      %v2134 = vrot.slane %v2112, %v2133
      %v2136 = vunpack.c.l.s4 1966171168
      %v2137 = vunpack.c.0.s8 %v2136
      %v2138 = vlaneseq
      %v2139 = vshrl.u32 %v2138, 7
      %v2140 = vsub.s32 %v2137, %v2139
      %v2141 = vrot.slane %v2113, %v2140
      %v2142 = vcombine.high %v2120, %v2120
      %v2143 = vcombine.high %v2127, %v2127
      %v2144 = vcombine.high %v2134, %v2134
      %v2145 = vcombine.high %v2141, %v2141
      %v2146 = vlaneseq
      %v2147 = vshrl.u32 %v2146, 7
      %v2148 = vsub.s32 0, %v2147
      %v2149 = vrot.slane %v2120, %v2148
      %v2150 = vlaneseq
      %v2151 = vshrl.u32 %v2150, 7
      %v2152 = vsub.s32 0, %v2151
      %v2153 = vrot.slane %v2134, %v2152
      %v2154 = vlaneseq
      %v2155 = vshrl.u32 %v2154, 7
      %v2156 = vsub.s32 0, %v2155
      %v2157 = vrot.slane %v2142, %v2156
      %v2158 = vlaneseq
      %v2159 = vshrl.u32 %v2158, 7
      %v2160 = vsub.s32 0, %v2159
      %v2161 = vrot.slane %v2144, %v2160
      %v2162 = vlaneseq
      %v2163 = vshrl.u32 %v2162, 7
      %v2164 = vsub.s32 0, %v2163
      %v2165 = vrot.slane %v2127, %v2164
      %v2166 = vlaneseq
      %v2167 = vshrl.u32 %v2166, 7
      %v2168 = vsub.s32 0, %v2167
      %v2169 = vrot.slane %v2141, %v2168
      %v2170 = vlaneseq
      %v2171 = vshrl.u32 %v2170, 7
      %v2172 = vsub.s32 0, %v2171
      %v2173 = vrot.slane %v2143, %v2172
      %v2174 = vlaneseq
      %v2175 = vshrl.u32 %v2174, 7
      %v2176 = vsub.s32 0, %v2175
      %v2177 = vrot.slane %v2145, %v2176
      %v2186 = vsub.f32 %v1778, %v2149
      %v2187 = vsub.f32 %v1783, %v2149
      %v2188 = vsub.f32 %v1788, %v2153
      %v2189 = vsub.f32 %v1793, %v2153
      %v2190 = vsub.f32 %v1798, %v2157
      %v2191 = vsub.f32 %v1803, %v2157
      %v2192 = vsub.f32 %v1808, %v2161
      %v2193 = vsub.f32 %v1813, %v2161
      %v2194 = vsub.f32 %v1818, %v2165
      %v2195 = vsub.f32 %v1823, %v2165
      %v2196 = vsub.f32 %v1828, %v2169
      %v2197 = vsub.f32 %v1833, %v2169
      %v2198 = vsub.f32 %v1838, %v2173
      %v2199 = vsub.f32 %v1843, %v2173
      %v2200 = vsub.f32 %v1848, %v2177
      %v2201 = vsub.f32 %v1853, %v2177
      %v2203 = vcombine.high %v2095, %v2095
      %v2205 = vunpack.c.l.s4 1966171168
      %v2206 = vunpack.c.0.s8 %v2205
      %v2207 = vlaneseq
      %v2208 = vshrl.u32 %v2207, 7
      %v2209 = vsub.s32 %v2206, %v2208
      %v2210 = vrot.slane %v2095, %v2209
      %v2212 = vunpack.c.l.s4 1966171168
      %v2213 = vunpack.c.0.s8 %v2212
      %v2214 = vlaneseq
      %v2215 = vshrl.u32 %v2214, 7
      %v2216 = vsub.s32 %v2213, %v2215
      %v2217 = vrot.slane %v2203, %v2216
      %v2218 = vcombine.high %v2210, %v2210
      %v2219 = vcombine.high %v2217, %v2217
      %v2221 = vunpack.c.l.s4 1966171168
      %v2222 = vunpack.c.0.s8 %v2221
      %v2223 = vlaneseq
      %v2224 = vshrl.u32 %v2223, 7
      %v2225 = vsub.s32 %v2222, %v2224
      %v2226 = vrot.slane %v2210, %v2225
      %v2228 = vunpack.c.l.s4 1966171168
      %v2229 = vunpack.c.0.s8 %v2228
      %v2230 = vlaneseq
      %v2231 = vshrl.u32 %v2230, 7
      %v2232 = vsub.s32 %v2229, %v2231
      %v2233 = vrot.slane %v2217, %v2232
      %v2235 = vunpack.c.l.s4 1966171168
      %v2236 = vunpack.c.0.s8 %v2235
      %v2237 = vlaneseq
      %v2238 = vshrl.u32 %v2237, 7
      %v2239 = vsub.s32 %v2236, %v2238
      %v2240 = vrot.slane %v2218, %v2239
      %v2242 = vunpack.c.l.s4 1966171168
      %v2243 = vunpack.c.0.s8 %v2242
      %v2244 = vlaneseq
      %v2245 = vshrl.u32 %v2244, 7
      %v2246 = vsub.s32 %v2243, %v2245
      %v2247 = vrot.slane %v2219, %v2246
      %v2248 = vcombine.high %v2226, %v2226
      %v2249 = vcombine.high %v2233, %v2233
      %v2250 = vcombine.high %v2240, %v2240
      %v2251 = vcombine.high %v2247, %v2247
      %v2252 = vlaneseq
      %v2253 = vshrl.u32 %v2252, 7
      %v2254 = vsub.s32 0, %v2253
      %v2255 = vrot.slane %v2226, %v2254
      %v2256 = vlaneseq
      %v2257 = vshrl.u32 %v2256, 7
      %v2258 = vsub.s32 0, %v2257
      %v2259 = vrot.slane %v2240, %v2258
      %v2260 = vlaneseq
      %v2261 = vshrl.u32 %v2260, 7
      %v2262 = vsub.s32 0, %v2261
      %v2263 = vrot.slane %v2248, %v2262
      %v2264 = vlaneseq
      %v2265 = vshrl.u32 %v2264, 7
      %v2266 = vsub.s32 0, %v2265
      %v2267 = vrot.slane %v2250, %v2266
      %v2268 = vlaneseq
      %v2269 = vshrl.u32 %v2268, 7
      %v2270 = vsub.s32 0, %v2269
      %v2271 = vrot.slane %v2233, %v2270
      %v2272 = vlaneseq
      %v2273 = vshrl.u32 %v2272, 7
      %v2274 = vsub.s32 0, %v2273
      %v2275 = vrot.slane %v2247, %v2274
      %v2276 = vlaneseq
      %v2277 = vshrl.u32 %v2276, 7
      %v2278 = vsub.s32 0, %v2277
      %v2279 = vrot.slane %v2249, %v2278
      %v2280 = vlaneseq
      %v2281 = vshrl.u32 %v2280, 7
      %v2282 = vsub.s32 0, %v2281
      %v2283 = vrot.slane %v2251, %v2282
      %v2292 = vmul.f32 %v2186, %v2255
      %v2293 = vmul.f32 %v2187, %v2255
      %v2294 = vmul.f32 %v2188, %v2259
      %v2295 = vmul.f32 %v2189, %v2259
      %v2296 = vmul.f32 %v2190, %v2263
      %v2297 = vmul.f32 %v2191, %v2263
      %v2298 = vmul.f32 %v2192, %v2267
      %v2299 = vmul.f32 %v2193, %v2267
      %v2300 = vmul.f32 %v2194, %v2271
      %v2301 = vmul.f32 %v2195, %v2271
      %v2302 = vmul.f32 %v2196, %v2275
      %v2303 = vmul.f32 %v2197, %v2275
      %v2304 = vmul.f32 %v2198, %v2279
      %v2305 = vmul.f32 %v2199, %v2279
      %v2306 = vmul.f32 %v2200, %v2283
      %v2307 = vmul.f32 %v2201, %v2283
      %v2308 = vadd.f32 %v2292, %v206
      %v2309 = vadd.f32 %v2293, %v207
      %v2310 = vadd.f32 %v2294, %v208
      %v2311 = vadd.f32 %v2295, %v209
      %v2312 = vadd.f32 %v2296, %v210
      %v2313 = vadd.f32 %v2297, %v211
      %v2314 = vadd.f32 %v2298, %v212
      %v2315 = vadd.f32 %v2299, %v213
      %v2316 = vadd.f32 %v2300, %v214
      %v2317 = vadd.f32 %v2301, %v215
      %v2318 = vadd.f32 %v2302, %v216
      %v2319 = vadd.f32 %v2303, %v217
      %v2320 = vadd.f32 %v2304, %v218
      %v2321 = vadd.f32 %v2305, %v219
      %v2322 = vadd.f32 %v2306, %v220
      %v2323 = vadd.f32 %v2307, %v221
      %vm2324 = vcmp.gt.f32.partialorder %v2308, 0.0
      %vm2325 = vcmp.gt.f32.partialorder %v2309, 0.0
      %vm2326 = vcmp.gt.f32.partialorder %v2310, 0.0
      %vm2327 = vcmp.gt.f32.partialorder %v2311, 0.0
      %vm2328 = vcmp.gt.f32.partialorder %v2312, 0.0
      %vm2329 = vcmp.gt.f32.partialorder %v2313, 0.0
      %vm2330 = vcmp.gt.f32.partialorder %v2314, 0.0
      %vm2331 = vcmp.gt.f32.partialorder %v2315, 0.0
      %vm2332 = vcmp.gt.f32.partialorder %v2316, 0.0
      %vm2333 = vcmp.gt.f32.partialorder %v2317, 0.0
      %vm2334 = vcmp.gt.f32.partialorder %v2318, 0.0
      %vm2335 = vcmp.gt.f32.partialorder %v2319, 0.0
      %vm2336 = vcmp.gt.f32.partialorder %v2320, 0.0
      %vm2337 = vcmp.gt.f32.partialorder %v2321, 0.0
      %vm2338 = vcmp.gt.f32.partialorder %v2322, 0.0
      %vm2339 = vcmp.gt.f32.partialorder %v2323, 0.0
      %v2340 = vmul.f32 %v2308, 0.2
      %v2341 = vmul.f32 %v2309, 0.2
      %v2342 = vmul.f32 %v2310, 0.2
      %v2343 = vmul.f32 %v2311, 0.2
      %v2344 = vmul.f32 %v2312, 0.2
      %v2345 = vmul.f32 %v2313, 0.2
      %v2346 = vmul.f32 %v2314, 0.2
      %v2347 = vmul.f32 %v2315, 0.2
      %v2348 = vmul.f32 %v2316, 0.2
      %v2349 = vmul.f32 %v2317, 0.2
      %v2350 = vmul.f32 %v2318, 0.2
      %v2351 = vmul.f32 %v2319, 0.2
      %v2352 = vmul.f32 %v2320, 0.2
      %v2353 = vmul.f32 %v2321, 0.2
      %v2354 = vmul.f32 %v2322, 0.2
      %v2355 = vmul.f32 %v2323, 0.2
      %v2356 = vsel %vm2324, %v2308, %v2340
      %v2357 = vsel %vm2325, %v2309, %v2341
      %v2358 = vsel %vm2326, %v2310, %v2342
      %v2359 = vsel %vm2327, %v2311, %v2343
      %v2360 = vsel %vm2328, %v2312, %v2344
      %v2361 = vsel %vm2329, %v2313, %v2345
      %v2362 = vsel %vm2330, %v2314, %v2346
      %v2363 = vsel %vm2331, %v2315, %v2347
      %v2364 = vsel %vm2332, %v2316, %v2348
      %v2365 = vsel %vm2333, %v2317, %v2349
      %v2366 = vsel %vm2334, %v2318, %v2350
      %v2367 = vsel %vm2335, %v2319, %v2351
      %v2368 = vsel %vm2336, %v2320, %v2352
      %v2369 = vsel %vm2337, %v2321, %v2353
      %v2370 = vsel %vm2338, %v2322, %v2354
      %v2371 = vsel %vm2339, %v2323, %v2355
      %2372 = vst [vmem:[%s204] sm:$0xff] %v2356
      %2373 = vst [vmem:[%s204 + $0x8] sm:$0xff] %v2357
      %2374 = vst [vmem:[%s204 + $0x10] sm:$0xff] %v2358
      %2375 = vst [vmem:[%s204 + $0x18] sm:$0xff] %v2359
      %2376 = vst [vmem:[%s204 + $0x20] sm:$0xff] %v2360
      %2377 = vst [vmem:[%s204 + $0x28] sm:$0xff] %v2361
      %2378 = vst [vmem:[%s204 + $0x30] sm:$0xff] %v2362
      %2379 = vst [vmem:[%s204 + $0x38] sm:$0xff] %v2363
      %2380 = vst [vmem:[%s204 + $0x40] sm:$0xff] %v2364
      %2381 = vst [vmem:[%s204 + $0x48] sm:$0xff] %v2365
      %2382 = vst [vmem:[%s204 + $0x50] sm:$0xff] %v2366
      %2383 = vst [vmem:[%s204 + $0x58] sm:$0xff] %v2367
      %2384 = vst [vmem:[%s204 + $0x60] sm:$0xff] %v2368
      %2385 = vst [vmem:[%s204 + $0x68] sm:$0xff] %v2369
      %2386 = vst [vmem:[%s204 + $0x70] sm:$0xff] %v2370
      %2387 = vst [vmem:[%s204 + $0x78] sm:$0xff] %v2371
      %s2388 = smul.u32 8, %s15
      %p2389 = scmp.lt.s32.totalorder %s2388, 15
      %s2390 = scalar_select %p2389, %s2388, 15
      %s2391 = smul.addr %s2390, 2
      %s2392 = smul.addr %s2391, 8
      %s2393 = scalar_lea.vmem %s4, %s2392
      // Predicated region
      $region37: #{residual_block.1} parent=35 // pred_check
        %p2394 = pneg %p122
      $region38: #{residual_block.1} parent=35 // pred_check_branch
        %2396 = sbr.rel (%p2394) target = $region40
      $region39: #{residual_block.1} parent=35 // pred_region
        %s2397 = smul.u32 8, %s15
      $region40: #{residual_block.1} parent=35 // pred_fallthru
        _
    $region36: #{residual_block.1} parent=5 // pred_fallthru
      _
    %p2398 = scmp.le.s32.totalorder 2, %s10
    // Predicated region
    $region41: #{residual_block.1} parent=5 // pred_check
      %p2399 = pneg %p2398
    $region42: #{residual_block.1} parent=5 // pred_check_branch
      %2401 = sbr.rel (%p2399) target = $region44
    $region43: #{residual_block.1} parent=5 // pred_region
      %s2402 = ssub.s32 %s10, 2
      // Predicated region
      $region45: #{residual_block.1} parent=43 // pred_check
        %p2403 = pneg %p128
      $region46: #{residual_block.1} parent=43 // pred_check_branch
        %2405 = sbr.rel (%p2403) target = $region48
      $region47: #{residual_block.1} parent=43 // pred_region
        %s2406 = smul.u32 8, %s16
        %p2407 = scmp.lt.s32.totalorder %s2406, 15
        %s2408 = scalar_select %p2407, %s2406, 15
        %s2409 = smul.addr %s2408, 2
        %s2410 = smul.addr %s2409, 8
        %s2411 = scalar_lea.vmem %s4, %s2410
      $region48: #{residual_block.1} parent=43 // pred_fallthru
        _
    $region44: #{residual_block.1} parent=5 // pred_fallthru
      _
  $region6: #{residual_block.1} parent=0 // loop_footer
    %s14 = sadd.s32 1, %s10
  $region7: #{residual_block.1} parent=0 // loop_footer_branch
    %9 = sbr.rel target = $region3
  $region8: #{residual_block.1} parent=0 // loop_exit
    _

</llo_original>
